<compile_context>
chip_gen: v5e
topology: v5e:2x2
jax: 0.10.0
libtpu: 0.0.40
codegen_flags: <defaults>
</compile_context>

<pallas_src>
import functools

import jax
import jax.numpy as jnp
from jax.experimental import pallas as pl
from jax.experimental.pallas import tpu as pltpu

_LANES = 128                      # lane-dense output width quantum
_ROW_ALIGN = 16                   # bf16 sublane packing for row tiles
_VMEM_LIMIT = 32 * 1024 * 1024    # safe scoped-VMEM request on v5e/v6e/v7x


def _round_up(v, m):
    return ((v + m - 1) // m) * m


def _pad_lanes(n):
    """Lane-dense width: 128 when n <= 128, else a multiple of 256 so the
    256-wide v6e/v7x MXU is filled (v5e's 128-wide MXU is fine either way)."""
    return _LANES if n <= _LANES else _round_up(n, 2 * _LANES)


def _pick_tm(m, tm_default):
    """Row-tile size: as large as tm_default but guaranteeing >= 2 grid steps when
    possible so both v7x TensorCores get work under dimension_semantics=('parallel',)."""
    half = _round_up(pl.cdiv(m, 2), _ROW_ALIGN)
    return max(_ROW_ALIGN, min(tm_default, half, _round_up(m, _ROW_ALIGN)))


# ----------------------------- Pallas kernels ------------------------------ #

def _branch_conv_kernel(a_ref, w_ref, bias_ref, o_ref, *, kk):
    """Fused offset+mask conv tile: (tm, 9C) @ (9C, Np) + bias; the modulation
    sigmoid is fused for lanes [2*kk, 3*kk)."""
    y = jnp.dot(a_ref[...], w_ref[...], preferred_element_type=jnp.float32)
    y = y + bias_ref[...]
    lane = jax.lax.broadcasted_iota(jnp.int32, y.shape, 1)
    is_mask = (lane >= 2 * kk) & (lane < 3 * kk)
    o_ref[...] = jnp.where(is_mask, jax.nn.sigmoid(y), y)


def _dcn_matmul_stats_kernel(a_ref, w_ref, o_ref, sum_ref, ssq_ref,
                             *, tm, m_valid, need_mask):
    """Main deformable-conv matmul tile with fused BatchNorm partial statistics.

    o_ref   : (tm, Np) bf16 conv output tile (f32 accumulation on the MXU).
    sum_ref : (1, 1, Np) f32 per-channel sum over the tile's VALID rows.
    ssq_ref : (1, 1, Np) f32 per-channel sum of squares over the VALID rows.
    Tail-row masking only happens on the last grid step (and only if M % tm != 0).
    """
    i = pl.program_id(0)
    acc = jnp.dot(a_ref[...], w_ref[...], preferred_element_type=jnp.float32)
    o_ref[...] = acc.astype(o_ref.dtype)

    def write_stats(a):
        sum_ref[...] = jnp.sum(a, axis=0, keepdims=True)[None]
        ssq_ref[...] = jnp.sum(a * a, axis=0, keepdims=True)[None]

    if need_mask:
        last = pl.num_programs(0) - 1

        @pl.when(i != last)
        def _():
            write_stats(acc)

        @pl.when(i == last)
        def _():
            row = i * tm + jax.lax.broadcasted_iota(jnp.int32, acc.shape, 0)
            write_stats(jnp.where(row < m_valid, acc, 0.0))
    else:
        write_stats(acc)


def _bn_relu_kernel(x_ref, scale_ref, shift_ref, o_ref):
    """Fused BN affine + ReLU; bf16 in, bf16 out (aliased in place), f32 math."""
    y = x_ref[...].astype(jnp.float32) * scale_ref[...] + shift_ref[...]
    o_ref[...] = jnp.maximum(y, 0.0).astype(o_ref.dtype)


# ----------------------------- Pallas wrappers ------------------------------ #

def branch_conv_matmul(a_bf16, w_bf16, bias_f32, kk, *, tm=512):
    """(M, 9C)bf16 @ (9C, Np)bf16 + bias, sigmoid on mask lanes.  M may be ragged."""
    M, K = a_bf16.shape
    _, Np = w_bf16.shape
    tm = _pick_tm(M, tm)
    grid = pl.cdiv(M, tm)
    kern = functools.partial(_branch_conv_kernel, kk=kk)
    return pl.pallas_call(
        kern,
        out_shape=jax.ShapeDtypeStruct((M, Np), jnp.float32),
        grid=(grid,),
        in_specs=[pl.BlockSpec((tm, K), lambda i: (i, 0)),
                  pl.BlockSpec((K, Np), lambda i: (0, 0)),
                  pl.BlockSpec((1, Np), lambda i: (0, 0))],
        out_specs=pl.BlockSpec((tm, Np), lambda i: (i, 0)),
        compiler_params=pltpu.CompilerParams(
            dimension_semantics=("parallel",),
            vmem_limit_bytes=_VMEM_LIMIT),
    )(a_bf16, w_bf16, bias_f32)


def dcn_matmul_stats(a_bf16, w_bf16, *, tm=512):
    """Main conv matmul (bf16 out) + fused per-tile BN statistics.  Safe for the
    'parallel' grid: each step owns its output block and its own stats block;
    partials are reduced by XLA afterwards."""
    M, K = a_bf16.shape
    _, Np = w_bf16.shape
    tm = _pick_tm(M, tm)
    grid = pl.cdiv(M, tm)
    need_mask = (M % tm) != 0
    kern = functools.partial(_dcn_matmul_stats_kernel,
                             tm=tm, m_valid=M, need_mask=need_mask)
    return pl.pallas_call(
        kern,
        out_shape=(jax.ShapeDtypeStruct((M, Np), jnp.bfloat16),
                   jax.ShapeDtypeStruct((grid, 1, Np), jnp.float32),
                   jax.ShapeDtypeStruct((grid, 1, Np), jnp.float32)),
        grid=(grid,),
        in_specs=[pl.BlockSpec((tm, K), lambda i: (i, 0)),
                  pl.BlockSpec((K, Np), lambda i: (0, 0))],
        out_specs=(pl.BlockSpec((tm, Np), lambda i: (i, 0)),
                   pl.BlockSpec((1, 1, Np), lambda i: (i, 0, 0)),
                   pl.BlockSpec((1, 1, Np), lambda i: (i, 0, 0))),
        compiler_params=pltpu.CompilerParams(
            dimension_semantics=("parallel",),
            vmem_limit_bytes=_VMEM_LIMIT),
    )(a_bf16, w_bf16)


def bn_relu(x_bf16, scale_row, shift_row, *, tm=512):
    """Fused affine-normalize + ReLU over a lane-dense (M, Np) bf16 slab, in place."""
    M, Np = x_bf16.shape
    tm = _pick_tm(M, tm)
    grid = pl.cdiv(M, tm)
    return pl.pallas_call(
        _bn_relu_kernel,
        out_shape=jax.ShapeDtypeStruct((M, Np), jnp.bfloat16),
        grid=(grid,),
        in_specs=[pl.BlockSpec((tm, Np), lambda i: (i, 0)),
                  pl.BlockSpec((1, Np), lambda i: (0, 0)),
                  pl.BlockSpec((1, Np), lambda i: (0, 0))],
        out_specs=pl.BlockSpec((tm, Np), lambda i: (i, 0)),
        input_output_aliases={0: 0},      # overwrite conv_out in place
        compiler_params=pltpu.CompilerParams(
            dimension_semantics=("parallel",),
            vmem_limit_bytes=_VMEM_LIMIT),
    )(x_bf16, scale_row, shift_row)


# ------------------------------- JAX glue ---------------------------------- #

def extract_patches_nhwc(x, K, stride, pad):
    """im2col: NHWC -> (N, Ho, Wo, K*K, C) with k = kh*K + kw ordering (bf16 in, bf16 out)."""
    # TODO(synk): the 9x im2col slab for the tiny offset/mask branch could be removed
    # by a shifted-window (kk reduction axis) BlockSpec; kept simple here.
    N, H, W, C = x.shape
    xp = jnp.pad(x, ((0, 0), (pad, pad), (pad, pad), (0, 0)))
    Ho = (H + 2 * pad - K) // stride + 1
    Wo = (W + 2 * pad - K) // stride + 1
    cols = []
    for kh in range(K):
        for kw in range(K):
            cols.append(xp[:, kh:kh + (Ho - 1) * stride + 1:stride,
                              kw:kw + (Wo - 1) * stride + 1:stride, :])
    return jnp.stack(cols, axis=3), Ho, Wo


def bilinear_sample(x, py, px):
    """Bilinear sampling of x (N,H,W,C) at float coords (py, px): (N,Ho,Wo,KK).
    Taps outside [0, H-1] x [0, W-1] contribute zero (torchvision semantics).
    Values/weights are kept in x.dtype (bf16) so the result feeds the MXU directly."""
    # TODO(synk): the data-dependent 4-tap gather stays in XLA; a manual-DMA in-kernel
    # gather (pl.ANY x + scalar-prefetched tap indices, paged-attention style) would
    # remove the largest remaining HBM intermediates.
    N, H, W, C = x.shape
    y0 = jnp.floor(py)
    x0 = jnp.floor(px)
    y1 = y0 + 1.0
    x1 = x0 + 1.0
    wy1 = py - y0
    wy0 = 1.0 - wy1
    wx1 = px - x0
    wx0 = 1.0 - wx1
    b_idx = jnp.arange(N).reshape(N, 1, 1, 1)

    def tap(yi, xi, w):
        valid = (yi >= 0) & (yi <= H - 1) & (xi >= 0) & (xi <= W - 1)
        yc = jnp.clip(yi, 0, H - 1).astype(jnp.int32)
        xc = jnp.clip(xi, 0, W - 1).astype(jnp.int32)
        v = x[b_idx, yc, xc]                                  # (N, Ho, Wo, KK, C)
        wb = jnp.where(valid, w, 0.0).astype(x.dtype)
        return v * wb[..., None]

    return (tap(y0, x0, wy0 * wx0) + tap(y0, x1, wy0 * wx1) +
            tap(y1, x0, wy1 * wx0) + tap(y1, x1, wy1 * wx1))


def deformable_cnv2_forward(x_nchw, params, kernel_size, stride):
    """Forward pass equivalent of deformableCNv2 (DCNv2 -> BN(train stats) -> ReLU)."""
    K = kernel_size
    KK = K * K
    pad = K // 2                                   # same rule as the PyTorch module
    x = jnp.transpose(x_nchw, (0, 2, 3, 1)).astype(jnp.float32)   # NCHW -> NHWC
    N, H, W, C = x.shape
    x_bf = x.astype(jnp.bfloat16)

    # --- fused offset + modulation branch: ONE 3x3 conv with 3*KK real output lanes,
    #     lane-dense 128-padded output, bias + mask-sigmoid fused in the kernel.
    patches, Ho, Wo = extract_patches_nhwc(x_bf, 3, stride, 1)    # bf16 im2col slab
    M = N * Ho * Wo
    a_br = patches.reshape(M, 9 * C)

    # Column order [dy_0..dy_KK) | dx_0..dx_KK) | mask_0..KK): contiguous lane slices
    # downstream.  p_w channels follow the torchvision (dy,dx)-interleaved convention.
    w_br = jnp.concatenate([params["p_w"][0::2], params["p_w"][1::2],
                            params["m_w"]], axis=0)               # (3KK, C, 3, 3)
    b_br = jnp.concatenate([params["p_b"][0::2], params["p_b"][1::2],
                            params["m_b"]], axis=0)               # (3KK,)
    n_br = w_br.shape[0]
    np_br = _pad_lanes(n_br)
    w_br_mat = jnp.transpose(w_br, (2, 3, 1, 0)).reshape(9 * C, n_br)
    w_br_mat = jnp.pad(w_br_mat, ((0, 0), (0, np_br - n_br))).astype(jnp.bfloat16)
    b_br_row = jnp.pad(b_br, (0, np_br - n_br)).reshape(1, np_br).astype(jnp.float32)
    br = branch_conv_matmul(a_br, w_br_mat, b_br_row, KK)         # (M, np_br) f32

    dy = br[:, 0 * KK:1 * KK].reshape(N, Ho, Wo, KK)
    dx = br[:, 1 * KK:2 * KK].reshape(N, Ho, Wo, KK)
    msk = br[:, 2 * KK:3 * KK].reshape(N, Ho, Wo, KK)             # sigmoid'ed in-kernel

    # --- deformable sampling positions -------------------------------------
    kh_idx = jnp.repeat(jnp.arange(K), K).astype(jnp.float32)     # (KK,)
    kw_idx = jnp.tile(jnp.arange(K), K).astype(jnp.float32)       # (KK,)
    base_y = (jnp.arange(Ho) * stride - pad).astype(jnp.float32)[:, None] + kh_idx[None, :]
    base_x = (jnp.arange(Wo) * stride - pad).astype(jnp.float32)[:, None] + kw_idx[None, :]
    py = base_y[None, :, None, :] + dy             # (N, Ho, Wo, KK)
    px = base_x[None, None, :, :] + dx             # (N, Ho, Wo, KK)

    # bf16 tap values * bf16 modulation mask -> the (M, KK*C) A-slab is bf16 directly.
    sampled = bilinear_sample(x_bf, py, px) * msk.astype(jnp.bfloat16)[..., None]
    a = sampled.reshape(M, KK * C)

    # --- main deformable conv: lane-dense bf16 Pallas matmul + fused BN stats ------
    Cout = params["w"].shape[0]
    npad = _pad_lanes(Cout)
    wmat = jnp.transpose(params["w"], (2, 3, 1, 0)).reshape(KK * C, Cout)
    wmat = jnp.pad(wmat, ((0, 0), (0, npad - Cout))).astype(jnp.bfloat16)
    conv_out, sums, ssqs = dcn_matmul_stats(a, wmat)   # (M,npad)bf16, 2x (G,1,npad)f32

    # --- BatchNorm2d (training-mode batch stats over the real M rows / Cout cols)
    # TODO(synk): single-pass sum/sumsq in f32 can lose precision for very large M
    # (mean-shifted per-tile accumulation would match PyTorch BN more closely at scale).
    eps = 1e-5
    ssum = jnp.sum(sums[:, 0, :Cout], axis=0)
    ssq = jnp.sum(ssqs[:, 0, :Cout], axis=0)
    mean = ssum / M
    var = jnp.maximum(ssq / M - mean * mean, 0.0)      # biased, like PyTorch training BN
    scale = params["bn_gamma"] / jnp.sqrt(var + eps)
    shift = params["bn_beta"] - mean * scale
    scale_row = jnp.pad(scale, (0, npad - Cout)).reshape(1, npad).astype(jnp.float32)
    shift_row = jnp.pad(shift, (0, npad - Cout)).reshape(1, npad).astype(jnp.float32)

    y = bn_relu(conv_out, scale_row, shift_row)        # fused affine + ReLU, in place
    y = y[:, :Cout].reshape(N, Ho, Wo, Cout).astype(jnp.float32)
    return jnp.transpose(y, (0, 3, 1, 2))              # back to NCHW


# --------------------------------- main ------------------------------------ #

if __name__ == "__main__":
    key = jax.random.PRNGKey(0)
    in_channels, out_channels, kernel_size, stride = 4, 8, 3, 1
    N, H, W = 2, 16, 16
    K = kernel_size
    KK = K * K

    ks = jax.random.split(key, 6)
    x = jax.random.normal(ks[0], (N, in_channels, H, W), jnp.float32)

    # Deterministic synthetic parameters (shapes follow the module's __init__).
    params = dict(
        # main DeformConv2 weight, bias=False
        w=jax.random.normal(ks[1], (out_channels, in_channels, K, K), jnp.float32) * 0.1,
        # offset branch: Conv2d(in, 2*K*K, 3, padding=1, stride=stride)
        p_w=jax.random.normal(ks[2], (2 * KK, in_channels, 3, 3), jnp.float32) * 0.05,
        p_b=jax.random.normal(ks[3], (2 * KK,), jnp.float32) * 0.05,
        # modulation branch: Conv2d(in, K*K, 3, padding=1, stride=stride)
        m_w=jax.random.normal(ks[4], (KK, in_channels, 3, 3), jnp.float32) * 0.05,
        m_b=jax.random.normal(ks[5], (KK,), jnp.float32) * 0.05,
        # BatchNorm2d affine parameters
        bn_gamma=jnp.ones((out_channels,), jnp.float32),
        bn_beta=jnp.zeros((out_channels,), jnp.float32),
    )

    fwd = jax.jit(deformable_cnv2_forward, static_argnums=(2, 3))
    y = fwd(x, params, kernel_size, stride)
    jax.block_until_ready(y)
    assert y.shape == (N, out_channels, H // stride, W // stride), y.shape
    assert bool(jnp.all(y >= 0.0))  # ReLU post-condition
    print("KERNEL_OK")
</pallas_src>

<mosaic_0001>
module attributes {stable_mosaic.version = 11 : i64} {
  func.func @_branch_conv_kernel(%arg0: i32, %arg1: memref<256x36xbf16, #tpu.memory_space<vmem>>, %arg2: memref<36x128xbf16, #tpu.memory_space<vmem>>, %arg3: memref<1x128xf32, #tpu.memory_space<vmem>>, %arg4: memref<256x128xf32, #tpu.memory_space<vmem>>) attributes {dimension_semantics = [#tpu.dimension_semantics<parallel>], iteration_bounds = array<i64: 2>, scalar_prefetch = 0 : i64, scratch_operands = 0 : i64, tpu.core_type = #tpu.core_type<tc>, window_params = [{transform_indices = @transform_0, window_bounds = array<i64: 256, 36>}, {pipeline_mode = #tpu.pipeline_mode<synchronous>, transform_indices = @transform_1, window_bounds = array<i64: 36, 128>}, {pipeline_mode = #tpu.pipeline_mode<synchronous>, transform_indices = @transform_2, window_bounds = array<i64: 1, 128>}, {transform_indices = @transform_3, window_bounds = array<i64: 256, 128>}]} {
    %c0 = arith.constant 0 : index
    %c0_0 = arith.constant 0 : index
    %0 = vector.load %arg1[%c0, %c0_0] : memref<256x36xbf16, #tpu.memory_space<vmem>>, vector<256x36xbf16>
    %c0_1 = arith.constant 0 : index
    %c0_2 = arith.constant 0 : index
    %1 = vector.load %arg2[%c0_1, %c0_2] : memref<36x128xbf16, #tpu.memory_space<vmem>>, vector<36x128xbf16>
    %cst = arith.constant dense<0.000000e+00> : vector<256x128xf32>
    %2 = tpu.matmul %0, %1, %cst {dimension_numbers = #tpu.dot_dimension_numbers<[1], [0], [0], [1], [0, 0, 1, 1], [], []>} : vector<256x36xbf16>, vector<36x128xbf16>, vector<256x128xf32> -> vector<256x128xf32>
    %c0_3 = arith.constant 0 : index
    %c0_4 = arith.constant 0 : index
    %3 = vector.load %arg3[%c0_3, %c0_4] : memref<1x128xf32, #tpu.memory_space<vmem>>, vector<1x128xf32>
    %4 = vector.broadcast %3 : vector<1x128xf32> to vector<256x128xf32>
    %5 = arith.addf %2, %4 : vector<256x128xf32>
    %6 = tpu.iota {dimensions = array<i32: 1>} : vector<256x128xi32>
    %c18_i32 = arith.constant 18 : i32
    %7 = vector.broadcast %c18_i32 : i32 to vector<256x128xi32>
    %8 = arith.cmpi sge, %6, %7 : vector<256x128xi32>
    %c27_i32 = arith.constant 27 : i32
    %9 = vector.broadcast %c27_i32 : i32 to vector<256x128xi32>
    %10 = arith.cmpi slt, %6, %9 : vector<256x128xi32>
    %11 = arith.andi %8, %10 : vector<256x128xi1>
    %12 = arith.negf %5 : vector<256x128xf32>
    %13 = math.exp %12 : vector<256x128xf32>
    %cst_5 = arith.constant 1.000000e+00 : f32
    %14 = vector.broadcast %cst_5 : f32 to vector<256x128xf32>
    %15 = arith.addf %14, %13 : vector<256x128xf32>
    %16 = arith.divf %14, %15 : vector<256x128xf32>
    %17 = arith.select %11, %16, %5 : vector<256x128xi1>, vector<256x128xf32>
    %c0_6 = arith.constant 0 : index
    %c0_7 = arith.constant 0 : index
    %18 = vector.load %arg4[%c0_6, %c0_7] : memref<256x128xf32, #tpu.memory_space<vmem>>, vector<256x128xf32>
    tpu.vector_store %arg4[%c0_6, %c0_7], %17 {strides = array<i32>} : memref<256x128xf32, #tpu.memory_space<vmem>>, vector<256x128xf32>,
    return
  }
  func.func @transform_0(%arg0: i32) -> (i32, i32) {
    %c0_i32 = arith.constant 0 : i32
    %c0_i32_0 = arith.constant 0 : i32
    return %arg0, %c0_i32 : i32, i32
  }
  func.func @transform_1(%arg0: i32) -> (i32, i32) {
    %c0_i32 = arith.constant 0 : i32
    %c0_i32_0 = arith.constant 0 : i32
    %c0_i32_1 = arith.constant 0 : i32
    return %c0_i32, %c0_i32_0 : i32, i32
  }
  func.func @transform_2(%arg0: i32) -> (i32, i32) {
    %c0_i32 = arith.constant 0 : i32
    %c0_i32_0 = arith.constant 0 : i32
    %c0_i32_1 = arith.constant 0 : i32
    return %c0_i32, %c0_i32_0 : i32, i32
  }
  func.func @transform_3(%arg0: i32) -> (i32, i32) {
    %c0_i32 = arith.constant 0 : i32
    %c0_i32_0 = arith.constant 0 : i32
    return %arg0, %c0_i32 : i32, i32
  }
}

module attributes {stable_mosaic.version = 11 : i64} {
  func.func @_dcn_matmul_stats_kernel(%arg0: i32, %arg1: memref<256x36xbf16, #tpu.memory_space<vmem>>, %arg2: memref<36x128xbf16, #tpu.memory_space<vmem>>, %arg3: memref<256x128xbf16, #tpu.memory_space<vmem>>, %arg4: memref<1x1x128xf32, #tpu.memory_space<vmem>>, %arg5: memref<1x1x128xf32, #tpu.memory_space<vmem>>) attributes {dimension_semantics = [#tpu.dimension_semantics<parallel>], iteration_bounds = array<i64: 2>, scalar_prefetch = 0 : i64, scratch_operands = 0 : i64, tpu.core_type = #tpu.core_type<tc>, window_params = [{transform_indices = @transform_0, window_bounds = array<i64: 256, 36>}, {pipeline_mode = #tpu.pipeline_mode<synchronous>, transform_indices = @transform_1, window_bounds = array<i64: 36, 128>}, {transform_indices = @transform_2, window_bounds = array<i64: 256, 128>}, {transform_indices = @transform_3, window_bounds = array<i64: 1, 1, 128>}, {transform_indices = @transform_4, window_bounds = array<i64: 1, 1, 128>}]} {
    %c0 = arith.constant 0 : index
    %c0_0 = arith.constant 0 : index
    %0 = vector.load %arg1[%c0, %c0_0] : memref<256x36xbf16, #tpu.memory_space<vmem>>, vector<256x36xbf16>
    %c0_1 = arith.constant 0 : index
    %c0_2 = arith.constant 0 : index
    %1 = vector.load %arg2[%c0_1, %c0_2] : memref<36x128xbf16, #tpu.memory_space<vmem>>, vector<36x128xbf16>
    %cst = arith.constant dense<0.000000e+00> : vector<256x128xf32>
    %2 = tpu.matmul %0, %1, %cst {dimension_numbers = #tpu.dot_dimension_numbers<[1], [0], [0], [1], [0, 0, 1, 1], [], []>} : vector<256x36xbf16>, vector<36x128xbf16>, vector<256x128xf32> -> vector<256x128xf32>
    %3 = arith.truncf %2 : vector<256x128xf32> to vector<256x128xbf16>
    %c0_3 = arith.constant 0 : index
    %c0_4 = arith.constant 0 : index
    %4 = vector.load %arg3[%c0_3, %c0_4] : memref<256x128xbf16, #tpu.memory_space<vmem>>, vector<256x128xbf16>
    tpu.vector_store %arg3[%c0_3, %c0_4], %3 {strides = array<i32>} : memref<256x128xbf16, #tpu.memory_space<vmem>>, vector<256x128xbf16>,
    %cst_5 = arith.constant dense<0.000000e+00> : vector<128xf32>
    %5 = vector.multi_reduction <add>, %2, %cst_5 [0] : vector<256x128xf32> to vector<128xf32>
    %6 = vector.shape_cast %5 : vector<128xf32> to vector<1x128xf32>
    %7 = vector.shape_cast %6 : vector<1x128xf32> to vector<1x1x128xf32>
    %c0_6 = arith.constant 0 : index
    %c0_7 = arith.constant 0 : index
    %c0_8 = arith.constant 0 : index
    %8 = vector.load %arg4[%c0_6, %c0_7, %c0_8] : memref<1x1x128xf32, #tpu.memory_space<vmem>>, vector<1x1x128xf32>
    tpu.vector_store %arg4[%c0_6, %c0_7, %c0_8], %7 {strides = array<i32>} : memref<1x1x128xf32, #tpu.memory_space<vmem>>, vector<1x1x128xf32>,
    %9 = arith.mulf %2, %2 : vector<256x128xf32>
    %cst_9 = arith.constant dense<0.000000e+00> : vector<128xf32>
    %10 = vector.multi_reduction <add>, %9, %cst_9 [0] : vector<256x128xf32> to vector<128xf32>
    %11 = vector.shape_cast %10 : vector<128xf32> to vector<1x128xf32>
    %12 = vector.shape_cast %11 : vector<1x128xf32> to vector<1x1x128xf32>
    %c0_10 = arith.constant 0 : index
    %c0_11 = arith.constant 0 : index
    %c0_12 = arith.constant 0 : index
    %13 = vector.load %arg5[%c0_10, %c0_11, %c0_12] : memref<1x1x128xf32, #tpu.memory_space<vmem>>, vector<1x1x128xf32>
    tpu.vector_store %arg5[%c0_10, %c0_11, %c0_12], %12 {strides = array<i32>} : memref<1x1x128xf32, #tpu.memory_space<vmem>>, vector<1x1x128xf32>,
    return
  }
  func.func @transform_0(%arg0: i32) -> (i32, i32) {
    %c0_i32 = arith.constant 0 : i32
    %c0_i32_0 = arith.constant 0 : i32
    return %arg0, %c0_i32 : i32, i32
  }
  func.func @transform_1(%arg0: i32) -> (i32, i32) {
    %c0_i32 = arith.constant 0 : i32
    %c0_i32_0 = arith.constant 0 : i32
    %c0_i32_1 = arith.constant 0 : i32
    return %c0_i32, %c0_i32_0 : i32, i32
  }
  func.func @transform_2(%arg0: i32) -> (i32, i32) {
    %c0_i32 = arith.constant 0 : i32
    %c0_i32_0 = arith.constant 0 : i32
    return %arg0, %c0_i32 : i32, i32
  }
  func.func @transform_3(%arg0: i32) -> (i32, i32, i32) {
    %c0_i32 = arith.constant 0 : i32
    %c0_i32_0 = arith.constant 0 : i32
    %c0_i32_1 = arith.constant 0 : i32
    return %arg0, %c0_i32, %c0_i32_0 : i32, i32, i32
  }
  func.func @transform_4(%arg0: i32) -> (i32, i32, i32) {
    %c0_i32 = arith.constant 0 : i32
    %c0_i32_0 = arith.constant 0 : i32
    %c0_i32_1 = arith.constant 0 : i32
    return %arg0, %c0_i32, %c0_i32_0 : i32, i32, i32
  }
}

module attributes {stable_mosaic.version = 11 : i64} {
  func.func @_bn_relu_kernel(%arg0: i32, %arg1: memref<256x128xbf16, #tpu.memory_space<vmem>>, %arg2: memref<1x128xf32, #tpu.memory_space<vmem>>, %arg3: memref<1x128xf32, #tpu.memory_space<vmem>>, %arg4: memref<256x128xbf16, #tpu.memory_space<vmem>>) attributes {dimension_semantics = [#tpu.dimension_semantics<parallel>], iteration_bounds = array<i64: 2>, scalar_prefetch = 0 : i64, scratch_operands = 0 : i64, tpu.core_type = #tpu.core_type<tc>, window_params = [{transform_indices = @transform_0, window_bounds = array<i64: 256, 128>}, {pipeline_mode = #tpu.pipeline_mode<synchronous>, transform_indices = @transform_1, window_bounds = array<i64: 1, 128>}, {pipeline_mode = #tpu.pipeline_mode<synchronous>, transform_indices = @transform_2, window_bounds = array<i64: 1, 128>}, {transform_indices = @transform_3, window_bounds = array<i64: 256, 128>}]} {
    %c0 = arith.constant 0 : index
    %c0_0 = arith.constant 0 : index
    %0 = vector.load %arg1[%c0, %c0_0] : memref<256x128xbf16, #tpu.memory_space<vmem>>, vector<256x128xbf16>
    %1 = arith.extf %0 : vector<256x128xbf16> to vector<256x128xf32>
    %c0_1 = arith.constant 0 : index
    %c0_2 = arith.constant 0 : index
    %2 = vector.load %arg2[%c0_1, %c0_2] : memref<1x128xf32, #tpu.memory_space<vmem>>, vector<1x128xf32>
    %3 = vector.broadcast %2 : vector<1x128xf32> to vector<256x128xf32>
    %4 = arith.mulf %1, %3 : vector<256x128xf32>
    %c0_3 = arith.constant 0 : index
    %c0_4 = arith.constant 0 : index
    %5 = vector.load %arg3[%c0_3, %c0_4] : memref<1x128xf32, #tpu.memory_space<vmem>>, vector<1x128xf32>
    %6 = vector.broadcast %5 : vector<1x128xf32> to vector<256x128xf32>
    %7 = arith.addf %4, %6 : vector<256x128xf32>
    %cst = arith.constant 0.000000e+00 : f32
    %8 = vector.broadcast %cst : f32 to vector<256x128xf32>
    %9 = arith.maximumf %7, %8 : vector<256x128xf32>
    %10 = arith.truncf %9 : vector<256x128xf32> to vector<256x128xbf16>
    %c0_5 = arith.constant 0 : index
    %c0_6 = arith.constant 0 : index
    %11 = vector.load %arg4[%c0_5, %c0_6] : memref<256x128xbf16, #tpu.memory_space<vmem>>, vector<256x128xbf16>
    tpu.vector_store %arg4[%c0_5, %c0_6], %10 {strides = array<i32>} : memref<256x128xbf16, #tpu.memory_space<vmem>>, vector<256x128xbf16>,
    return
  }
  func.func @transform_0(%arg0: i32) -> (i32, i32) {
    %c0_i32 = arith.constant 0 : i32
    %c0_i32_0 = arith.constant 0 : i32
    return %arg0, %c0_i32 : i32, i32
  }
  func.func @transform_1(%arg0: i32) -> (i32, i32) {
    %c0_i32 = arith.constant 0 : i32
    %c0_i32_0 = arith.constant 0 : i32
    %c0_i32_1 = arith.constant 0 : i32
    return %c0_i32, %c0_i32_0 : i32, i32
  }
  func.func @transform_2(%arg0: i32) -> (i32, i32) {
    %c0_i32 = arith.constant 0 : i32
    %c0_i32_0 = arith.constant 0 : i32
    %c0_i32_1 = arith.constant 0 : i32
    return %c0_i32, %c0_i32_0 : i32, i32
  }
  func.func @transform_3(%arg0: i32) -> (i32, i32) {
    %c0_i32 = arith.constant 0 : i32
    %c0_i32_0 = arith.constant 0 : i32
    return %arg0, %c0_i32 : i32, i32
  }
}

</mosaic_0001>

<llo_original>
// kernel: deformable_cnv2_forward.3
$region0: #{deformable_cnv2_forward.3}
  #allocation0 [shape = 'u32[]', space=smem, size = 0x4, offset = 0x4, fixed_abs, tag = 'smem constant byte address 0x4 - core index']
  #allocation1 [shape = 'u32[72,128]{1,0:T(1,128)}', space=vmem, size = 0x9000, scoped, tag = 'internal scratch']
  %s0 = inlined_call_operand.vmem [shape: bf16[512,36], index: 0, kind: input, shape index: {}]
  %s1 = inlined_call_operand.vmem [shape: bf16[36,128], index: 1, kind: input, shape index: {}]
  %s2 = inlined_call_operand.vmem [shape: f32[1,128], index: 2, kind: input, shape index: {}]
  %s3 = inlined_call_operand.vmem [shape: f32[512,128], index: 3, kind: output, shape index: {}]
  %s4 = sld [smem:[#allocation0]]
  $region45: #{deformable_cnv2_forward.3} parent=0
    _
  %s6 = ssub.s32 1, %s4
  %s7 = scalar_select 0, %s6, %s4
  loop: start=0, step=1, limit=4
  $region2: #{deformable_cnv2_forward.3} parent=0 // loop_pre_header
    _
  $region3: #{deformable_cnv2_forward.3} parent=0 // loop_header
    %s9 = sphi 0, %s13
    %p10 = scmp.ge.s32.totalorder %s9, 4
    %s19 = sphi 0, %s21
    %s22 = sphi 0, %s19
    %s23 = sphi 0, %s22
    %s39 = sphi 0, %s23
    %s43 = sphi 0, %s43
    %s45 = sphi 0, %s43
    %s46 = sphi 0, %s45
    %s60 = sphi 0, %s46
    %s64 = sphi 0, %s64
    %s66 = sphi 0, %s64
    %s67 = sphi 0, %s66
    %s81 = sphi 0, %s67
    %s87 = sphi 0, %s89
    %s90 = sphi 0, %s87
    %s91 = sphi 0, %s90
    %s107 = sphi 0, %s91
  $region4: #{deformable_cnv2_forward.3} parent=0 // loop_header_branch
    %12 = sbr.rel (%p10) target = $region8
  $region5: #{deformable_cnv2_forward.3} parent=0 // loop_body
    %s14 = ssub.s32 %s9, 1
    %s15 = ssub.s32 %s9, 2
    %s16 = sadd.s32 %s9, 1
    %s17 = ssub.s32 %s9, %s16
    %p18 = scmp.eq.s32.totalorder %s17, 0
    %s20 = sadd.s32 %s19, 1
    %s21 = scalar_select %p18, %s19, %s20
    %p24 = pneg %p18
    %p25 = scmp.eq.s32.totalorder %s9, 1
    %p26 = por %p24, %p25
    %p27 = scmp.ne.s32.totalorder %s19, %s22
    %p28 = scmp.eq.s32.totalorder %s9, 0
    %p29 = por %p27, %p28
    %p30 = scmp.ne.s32.totalorder %s19, %s22
    %p31 = scmp.eq.s32.totalorder %s14, 1
    %p32 = por %p30, %p31
    %p33 = scmp.ne.s32.totalorder %s22, %s23
    %p34 = scmp.eq.s32.totalorder %s14, 0
    %p35 = por %p33, %p34
    %p36 = scmp.ne.s32.totalorder %s22, %s23
    %p37 = scmp.eq.s32.totalorder %s15, 1
    %p38 = por %p36, %p37
    %p40 = scmp.ne.s32.totalorder %s23, %s39
    %p41 = scmp.eq.s32.totalorder %s15, 0
    %p42 = por %p40, %p41
    %s44 = sadd.s32 %s43, 1
    %p47 = scmp.eq.s32.totalorder %s9, 1
    %p48 = scmp.ne.s32.totalorder %s43, %s45
    %p49 = scmp.eq.s32.totalorder %s9, 0
    %p50 = por %p48, %p49
    %p51 = scmp.ne.s32.totalorder %s43, %s45
    %p52 = scmp.eq.s32.totalorder %s14, 1
    %p53 = por %p51, %p52
    %p54 = scmp.ne.s32.totalorder %s45, %s46
    %p55 = scmp.eq.s32.totalorder %s14, 0
    %p56 = por %p54, %p55
    %p57 = scmp.ne.s32.totalorder %s45, %s46
    %p58 = scmp.eq.s32.totalorder %s15, 1
    %p59 = por %p57, %p58
    %p61 = scmp.ne.s32.totalorder %s46, %s60
    %p62 = scmp.eq.s32.totalorder %s15, 0
    %p63 = por %p61, %p62
    %s65 = sadd.s32 %s64, 1
    %p68 = scmp.eq.s32.totalorder %s9, 1
    %p69 = scmp.ne.s32.totalorder %s64, %s66
    %p70 = scmp.eq.s32.totalorder %s9, 0
    %p71 = por %p69, %p70
    %p72 = scmp.ne.s32.totalorder %s64, %s66
    %p73 = scmp.eq.s32.totalorder %s14, 1
    %p74 = por %p72, %p73
    %p75 = scmp.ne.s32.totalorder %s66, %s67
    %p76 = scmp.eq.s32.totalorder %s14, 0
    %p77 = por %p75, %p76
    %p78 = scmp.ne.s32.totalorder %s66, %s67
    %p79 = scmp.eq.s32.totalorder %s15, 1
    %p80 = por %p78, %p79
    %p82 = scmp.ne.s32.totalorder %s67, %s81
    %p83 = scmp.eq.s32.totalorder %s15, 0
    %p84 = por %p82, %p83
    %s85 = ssub.s32 %s9, %s16
    %p86 = scmp.eq.s32.totalorder %s85, 0
    %s88 = sadd.s32 %s87, 1
    %s89 = scalar_select %p86, %s87, %s88
    %p92 = pneg %p86
    %p93 = scmp.eq.s32.totalorder %s9, 1
    %p94 = por %p92, %p93
    %p95 = scmp.ne.s32.totalorder %s87, %s90
    %p96 = scmp.eq.s32.totalorder %s9, 0
    %p97 = por %p95, %p96
    %p98 = scmp.ne.s32.totalorder %s87, %s90
    %p99 = scmp.eq.s32.totalorder %s14, 1
    %p100 = por %p98, %p99
    %p101 = scmp.ne.s32.totalorder %s90, %s91
    %p102 = scmp.eq.s32.totalorder %s14, 0
    %p103 = por %p101, %p102
    %p104 = scmp.ne.s32.totalorder %s90, %s91
    %p105 = scmp.eq.s32.totalorder %s15, 1
    %p106 = por %p104, %p105
    %p108 = scmp.ne.s32.totalorder %s91, %s107
    %p109 = scmp.eq.s32.totalorder %s15, 0
    %p110 = por %p108, %p109
    %p111 = scmp.le.s32.totalorder 1, %s9
    %p112 = scmp.lt.s32.totalorder %s9, 3
    %p113 = pnand %p111, %p112
    %p114 = pneg %p113
    // Predicated region
    $region9: #{deformable_cnv2_forward.3} parent=5 // pred_check
      _
    $region10: #{deformable_cnv2_forward.3} parent=5 // pred_check_branch
      %116 = sbr.rel (%p113) target = $region12
    $region11: #{deformable_cnv2_forward.3} parent=5 // pred_region
      %s117 = ssub.s32 %s9, 1
      // Predicated region
      $region13: #{deformable_cnv2_forward.3} parent=11 // pred_check
        %p118 = pneg %p56
      $region14: #{deformable_cnv2_forward.3} parent=11 // pred_check_branch
        %120 = sbr.rel (%p118) target = $region16
      $region15: #{deformable_cnv2_forward.3} parent=11 // pred_region
        _
      $region16: #{deformable_cnv2_forward.3} parent=11 // pred_fallthru
        _
      // Predicated region
      $region17: #{deformable_cnv2_forward.3} parent=11 // pred_check
        %p121 = pneg %p77
      $region18: #{deformable_cnv2_forward.3} parent=11 // pred_check_branch
        %123 = sbr.rel (%p121) target = $region20
      $region19: #{deformable_cnv2_forward.3} parent=11 // pred_region
        _
      $region20: #{deformable_cnv2_forward.3} parent=11 // pred_fallthru
        _
    $region12: #{deformable_cnv2_forward.3} parent=5 // pred_fallthru
      _
    %p124 = scmp.lt.s32.totalorder %s9, 2
    // Predicated region
    $region21: #{deformable_cnv2_forward.3} parent=5 // pred_check
      %p125 = pneg %p124
    $region22: #{deformable_cnv2_forward.3} parent=5 // pred_check_branch
      %127 = sbr.rel (%p125) target = $region24
    $region23: #{deformable_cnv2_forward.3} parent=5 // pred_region
      // Predicated region
      $region25: #{deformable_cnv2_forward.3} parent=23 // pred_check
        %p128 = pneg %p29
      $region26: #{deformable_cnv2_forward.3} parent=23 // pred_check_branch
        %130 = sbr.rel (%p128) target = $region28
      $region27: #{deformable_cnv2_forward.3} parent=23 // pred_region
        %s131 = smul.u32 32, %s9
        %p132 = scmp.lt.s32.totalorder %s131, 63
        %s133 = scalar_select %p132, %s131, 63
        %s134 = smul.addr %s133, 4
        %s135 = scalar_lea.vmem %s0, %s134
        %s136 = smul.u32 32, %s9
      $region28: #{deformable_cnv2_forward.3} parent=23 // pred_fallthru
        _
    $region24: #{deformable_cnv2_forward.3} parent=5 // pred_fallthru
      _
    %p137 = scmp.le.s32.totalorder 1, %s9
    %p138 = scmp.lt.s32.totalorder %s9, 3
    %p139 = pnand %p137, %p138
    %p140 = pneg %p139
    // Predicated region
    $region29: #{deformable_cnv2_forward.3} parent=5 // pred_check
      _
    $region30: #{deformable_cnv2_forward.3} parent=5 // pred_check_branch
      %142 = sbr.rel (%p139) target = $region32
    $region31: #{deformable_cnv2_forward.3} parent=5 // pred_region
      %s143 = ssub.s32 %s9, 1
      %s144 = smul.u32 32, %s14
      %p145 = scmp.lt.s32.totalorder %s144, 63
      %s146 = scalar_select %p145, %s144, 63
      %s147 = smul.addr %s146, 4
      %s148 = scalar_lea.vmem %s0, %s147
      %p149 = pneg %p35
      %p150 = pneg %p32
      %p151 = pneg %p56
      %p152 = pneg %p53
      %p153 = pneg %p77
      %p154 = pneg %p74
      %p155 = pneg %p103
      %p156 = pneg %p100
      %s157 = smul.u32 32, %s14
      %p158 = scmp.lt.s32.totalorder %s157, 63
      %s159 = scalar_select %p158, %s157, 63
      %s160 = smul.addr %s159, 8
      %s161 = scalar_lea.vmem %s3, %s160
      %s162 = smul.u32 32, %s14
      %p163 = scmp.lt.s32.totalorder %s162, 63
      %s164 = scalar_select %p163, %s162, 63
      %s165 = smul.addr %s164, 4
      %s166 = scalar_lea.vmem %s0, %s165
      %s167 = smul.u32 32, %s14
      %s168 = smul.u32 32, %s14
      %p169 = scmp.lt.s32.totalorder %s168, 63
      %s170 = scalar_select %p169, %s168, 63
      %s171 = smul.addr %s170, 8
      %s172 = scalar_lea.vmem %s3, %s171
      %s173 = smul.u32 32, %s14
      %v175 = vld [vmem:[%s166] sm:$0xf]
      %v176 = vld [vmem:[%s166 + $0x4] sm:$0xf]
      %v177 = vld [vmem:[%s166 + $0x8] sm:$0xf]
      %v178 = vld [vmem:[%s166 + $0xc] sm:$0xf]
      %v179 = vld [vmem:[%s166 + $0x10] sm:$0xf]
      %v180 = vld [vmem:[%s166 + $0x14] sm:$0xf]
      %v181 = vld [vmem:[%s166 + $0x18] sm:$0xf]
      %v182 = vld [vmem:[%s166 + $0x1c] sm:$0xf]
      %v183 = vld [vmem:[%s166 + $0x20] sm:$0xf]
      %v184 = vld [vmem:[%s166 + $0x24] sm:$0xf]
      %v185 = vld [vmem:[%s166 + $0x28] sm:$0xf]
      %v186 = vld [vmem:[%s166 + $0x2c] sm:$0xf]
      %v187 = vld [vmem:[%s166 + $0x30] sm:$0xf]
      %v188 = vld [vmem:[%s166 + $0x34] sm:$0xf]
      %v189 = vld [vmem:[%s166 + $0x38] sm:$0xf]
      %v190 = vld [vmem:[%s166 + $0x3c] sm:$0xf]
      %v191 = vld [vmem:[%s166 + $0x40] sm:$0xf]
      %v192 = vld [vmem:[%s166 + $0x44] sm:$0xf]
      %v193 = vld [vmem:[%s166 + $0x48] sm:$0xf]
      %v194 = vld [vmem:[%s166 + $0x4c] sm:$0xf]
      %v195 = vld [vmem:[%s166 + $0x50] sm:$0xf]
      %v196 = vld [vmem:[%s166 + $0x54] sm:$0xf]
      %v197 = vld [vmem:[%s166 + $0x58] sm:$0xf]
      %v198 = vld [vmem:[%s166 + $0x5c] sm:$0xf]
      %v199 = vld [vmem:[%s166 + $0x60] sm:$0xf]
      %v200 = vld [vmem:[%s166 + $0x64] sm:$0xf]
      %v201 = vld [vmem:[%s166 + $0x68] sm:$0xf]
      %v202 = vld [vmem:[%s166 + $0x6c] sm:$0xf]
      %v203 = vld [vmem:[%s166 + $0x70] sm:$0xf]
      %v204 = vld [vmem:[%s166 + $0x74] sm:$0xf]
      %v205 = vld [vmem:[%s166 + $0x78] sm:$0xf]
      %v206 = vld [vmem:[%s166 + $0x7c] sm:$0xf]
      %v207 = vld [vmem:[%s1] sm:$0xf]
      %v208 = vld [vmem:[%s1 + $0x4] sm:$0xf]
      %v209 = vld [vmem:[%s1 + $0x8] sm:$0xf]
      %v210 = vld [vmem:[%s1 + $0xc] sm:$0xf]
      %v211 = vld [vmem:[%s1 + $0x10] sm:$0x3]
      %v212 = vld [vmem:[%s2] sm:$0x1]
      %v214 = vperm.slane %v212, 0
      %v248 = vunpack.c.l.b16 %v175
      %v249 = vunpack.c.l.b16 %v176
      %v250 = vunpack.c.l.b16 %v177
      %v251 = vunpack.c.l.b16 %v178
      %v252 = vunpack.c.l.b16 %v179
      %v253 = vunpack.c.l.b16 %v180
      %v254 = vunpack.c.l.b16 %v181
      %v255 = vunpack.c.l.b16 %v182
      %v256 = vunpack.c.l.b16 %v183
      %v257 = vunpack.c.l.b16 %v184
      %v258 = vunpack.c.l.b16 %v185
      %v259 = vunpack.c.l.b16 %v186
      %v260 = vunpack.c.l.b16 %v187
      %v261 = vunpack.c.l.b16 %v188
      %v262 = vunpack.c.l.b16 %v189
      %v263 = vunpack.c.l.b16 %v190
      %v264 = vunpack.c.l.b16 %v191
      %v265 = vunpack.c.l.b16 %v192
      %v266 = vunpack.c.l.b16 %v193
      %v267 = vunpack.c.l.b16 %v194
      %v268 = vunpack.c.l.b16 %v195
      %v269 = vunpack.c.l.b16 %v196
      %v270 = vunpack.c.l.b16 %v197
      %v271 = vunpack.c.l.b16 %v198
      %v272 = vunpack.c.l.b16 %v199
      %v273 = vunpack.c.l.b16 %v200
      %v274 = vunpack.c.l.b16 %v201
      %v275 = vunpack.c.l.b16 %v202
      %v276 = vunpack.c.l.b16 %v203
      %v277 = vunpack.c.l.b16 %v204
      %v278 = vunpack.c.l.b16 %v205
      %v279 = vunpack.c.l.b16 %v206
      %v280 = vpack.c.b16 %v249, %v248
      %v281 = vpack.c.b16 %v251, %v250
      %v282 = vpack.c.b16 %v253, %v252
      %v283 = vpack.c.b16 %v255, %v254
      %v284 = vpack.c.b16 %v257, %v256
      %v285 = vpack.c.b16 %v259, %v258
      %v286 = vpack.c.b16 %v261, %v260
      %v287 = vpack.c.b16 %v263, %v262
      %v288 = vpack.c.b16 %v265, %v264
      %v289 = vpack.c.b16 %v267, %v266
      %v290 = vpack.c.b16 %v269, %v268
      %v291 = vpack.c.b16 %v271, %v270
      %v292 = vpack.c.b16 %v273, %v272
      %v293 = vpack.c.b16 %v275, %v274
      %v294 = vpack.c.b16 %v277, %v276
      %v295 = vpack.c.b16 %v279, %v278
      %v301 = vunpack.c.l.b16 %v207
      %v302 = vunpack.c.l.b16 %v208
      %v303 = vunpack.c.l.b16 %v209
      %v304 = vunpack.c.l.b16 %v210
      %v305 = vunpack.c.l.b16 %v211
      %v306 = vpack.c.b16 %v302, %v301
      %v307 = vpack.c.b16 %v304, %v303
      %v308 = vpack.c.b16 %v305, %v305
      %vm311 = vcmask 293888
      %v313 = vsel %vm311, %v280, 0
      %v316 = vsel %vm311, %v281, 0
      %v319 = vsel %vm311, %v282, 0
      %v322 = vsel %vm311, %v283, 0
      %v325 = vsel %vm311, %v284, 0
      %v328 = vsel %vm311, %v285, 0
      %v331 = vsel %vm311, %v286, 0
      %v334 = vsel %vm311, %v287, 0
      %v337 = vsel %vm311, %v288, 0
      %v340 = vsel %vm311, %v289, 0
      %v343 = vsel %vm311, %v290, 0
      %v346 = vsel %vm311, %v291, 0
      %v349 = vsel %vm311, %v292, 0
      %v352 = vsel %vm311, %v293, 0
      %v355 = vsel %vm311, %v294, 0
      %v358 = vsel %vm311, %v295, 0
      %vm360 = vcmask 1041408
      %v362 = vsel %vm360, %v308, 0
      %364 = vmatpush.bf16.msra.mxu0 0
      %365 = vmatpush.bf16.msra.mxu0 0
      %366 = vmatpush.bf16.msra.mxu0 0
      %367 = vmatpush.bf16.msra.mxu0 0
      %368 = vmatpush.bf16.msra.mxu0 0
      %369 = vmatpush.bf16.msra.mxu0 %v362
      %370 = vmatpush.bf16.msra.mxu0 %v307
      %371 = vmatpush.bf16.msra.mxu0 %v306
      %372 = vmatmul.bf16.gmra.mxu0 %v313
      %v373 = vpop.f32.mrf.mxu0
      %v374 = vadd.f32 %v214, %v373
      %v375 = vpop.f32.mrf.mxu0
      %v376 = vadd.f32 %v214, %v375
      %377 = vmatmul.bf16.gmra.mxu0 %v316
      %v378 = vpop.f32.mrf.mxu0
      %v379 = vadd.f32 %v214, %v378
      %v380 = vpop.f32.mrf.mxu0
      %v381 = vadd.f32 %v214, %v380
      %382 = vmatmul.bf16.gmra.mxu0 %v319
      %v383 = vpop.f32.mrf.mxu0
      %v384 = vadd.f32 %v214, %v383
      %v385 = vpop.f32.mrf.mxu0
      %v386 = vadd.f32 %v214, %v385
      %387 = vmatmul.bf16.gmra.mxu0 %v322
      %v388 = vpop.f32.mrf.mxu0
      %v389 = vadd.f32 %v214, %v388
      %v390 = vpop.f32.mrf.mxu0
      %v391 = vadd.f32 %v214, %v390
      %392 = vmatmul.bf16.gmra.mxu0 %v325
      %v393 = vpop.f32.mrf.mxu0
      %v394 = vadd.f32 %v214, %v393
      %v395 = vpop.f32.mrf.mxu0
      %v396 = vadd.f32 %v214, %v395
      %397 = vmatmul.bf16.gmra.mxu0 %v328
      %v398 = vpop.f32.mrf.mxu0
      %v399 = vadd.f32 %v214, %v398
      %v400 = vpop.f32.mrf.mxu0
      %v401 = vadd.f32 %v214, %v400
      %402 = vmatmul.bf16.gmra.mxu0 %v331
      %v403 = vpop.f32.mrf.mxu0
      %v404 = vadd.f32 %v214, %v403
      %v405 = vpop.f32.mrf.mxu0
      %v406 = vadd.f32 %v214, %v405
      %407 = vmatmul.bf16.gmra.mxu0 %v334
      %v408 = vpop.f32.mrf.mxu0
      %v409 = vadd.f32 %v214, %v408
      %v410 = vpop.f32.mrf.mxu0
      %v411 = vadd.f32 %v214, %v410
      %412 = vmatmul.bf16.gmra.mxu0 %v337
      %v413 = vpop.f32.mrf.mxu0
      %v414 = vadd.f32 %v214, %v413
      %v415 = vpop.f32.mrf.mxu0
      %v416 = vadd.f32 %v214, %v415
      %417 = vmatmul.bf16.gmra.mxu0 %v340
      %v418 = vpop.f32.mrf.mxu0
      %v419 = vadd.f32 %v214, %v418
      %v420 = vpop.f32.mrf.mxu0
      %v421 = vadd.f32 %v214, %v420
      %422 = vmatmul.bf16.gmra.mxu0 %v343
      %v423 = vpop.f32.mrf.mxu0
      %v424 = vadd.f32 %v214, %v423
      %v425 = vpop.f32.mrf.mxu0
      %v426 = vadd.f32 %v214, %v425
      %427 = vmatmul.bf16.gmra.mxu0 %v346
      %v428 = vpop.f32.mrf.mxu0
      %v429 = vadd.f32 %v214, %v428
      %v430 = vpop.f32.mrf.mxu0
      %v431 = vadd.f32 %v214, %v430
      %432 = vmatmul.bf16.gmra.mxu0 %v349
      %v433 = vpop.f32.mrf.mxu0
      %v434 = vadd.f32 %v214, %v433
      %v435 = vpop.f32.mrf.mxu0
      %v436 = vadd.f32 %v214, %v435
      %437 = vmatmul.bf16.gmra.mxu0 %v352
      %v438 = vpop.f32.mrf.mxu0
      %v439 = vadd.f32 %v214, %v438
      %v440 = vpop.f32.mrf.mxu0
      %v441 = vadd.f32 %v214, %v440
      %442 = vmatmul.bf16.gmra.mxu0 %v355
      %v443 = vpop.f32.mrf.mxu0
      %v444 = vadd.f32 %v214, %v443
      %v445 = vpop.f32.mrf.mxu0
      %v446 = vadd.f32 %v214, %v445
      %447 = vmatmul.bf16.gmra.mxu0 %v358
      %v448 = vpop.f32.mrf.mxu0
      %v449 = vadd.f32 %v214, %v448
      %v450 = vpop.f32.mrf.mxu0
      %v451 = vadd.f32 %v214, %v450
      %452 = vdwg.mxu0
      %v453 = vlaneseq
      %v454 = vand.u32 %v453, 127
      %vm455 = vcmp.ge.s32.totalorder %v454, 18
      %vm456 = vcmp.lt.s32.totalorder %v454, 27
      %vm457 = vmand %vm455, %vm456
      %v458 = vxor.u32 %v374, 2147483648
      %v459 = vxor.u32 %v376, 2147483648
      %v460 = vxor.u32 %v379, 2147483648
      %v461 = vxor.u32 %v381, 2147483648
      %v462 = vxor.u32 %v384, 2147483648
      %v463 = vxor.u32 %v386, 2147483648
      %v464 = vxor.u32 %v389, 2147483648
      %v465 = vxor.u32 %v391, 2147483648
      %v466 = vxor.u32 %v394, 2147483648
      %v467 = vxor.u32 %v396, 2147483648
      %v468 = vxor.u32 %v399, 2147483648
      %v469 = vxor.u32 %v401, 2147483648
      %v470 = vxor.u32 %v404, 2147483648
      %v471 = vxor.u32 %v406, 2147483648
      %v472 = vxor.u32 %v409, 2147483648
      %v473 = vxor.u32 %v411, 2147483648
      %v474 = vxor.u32 %v414, 2147483648
      %v475 = vxor.u32 %v416, 2147483648
      %v476 = vxor.u32 %v419, 2147483648
      %v477 = vxor.u32 %v421, 2147483648
      %v478 = vxor.u32 %v424, 2147483648
      %v479 = vxor.u32 %v426, 2147483648
      %v480 = vxor.u32 %v429, 2147483648
      %v481 = vxor.u32 %v431, 2147483648
      %v482 = vxor.u32 %v434, 2147483648
      %v483 = vxor.u32 %v436, 2147483648
      %v484 = vxor.u32 %v439, 2147483648
      %v485 = vxor.u32 %v441, 2147483648
      %v486 = vxor.u32 %v444, 2147483648
      %v487 = vxor.u32 %v446, 2147483648
      %v488 = vxor.u32 %v449, 2147483648
      %v489 = vxor.u32 %v451, 2147483648
      %v490 = vmul.f32 %v458, 1.442695
      %v491 = vpow.pop %v490
      %v492 = vmul.f32 %v459, 1.442695
      %v493 = vpow.pop %v492
      %v494 = vmul.f32 %v460, 1.442695
      %v495 = vpow.pop %v494
      %v496 = vmul.f32 %v461, 1.442695
      %v497 = vpow.pop %v496
      %v498 = vmul.f32 %v462, 1.442695
      %v499 = vpow.pop %v498
      %v500 = vmul.f32 %v463, 1.442695
      %v501 = vpow.pop %v500
      %v502 = vmul.f32 %v464, 1.442695
      %v503 = vpow.pop %v502
      %v504 = vmul.f32 %v465, 1.442695
      %v505 = vpow.pop %v504
      %v506 = vmul.f32 %v466, 1.442695
      %v507 = vpow.pop %v506
      %v508 = vmul.f32 %v467, 1.442695
      %v509 = vpow.pop %v508
      %v510 = vmul.f32 %v468, 1.442695
      %v511 = vpow.pop %v510
      %v512 = vmul.f32 %v469, 1.442695
      %v513 = vpow.pop %v512
      %v514 = vmul.f32 %v470, 1.442695
      %v515 = vpow.pop %v514
      %v516 = vmul.f32 %v471, 1.442695
      %v517 = vpow.pop %v516
      %v518 = vmul.f32 %v472, 1.442695
      %v519 = vpow.pop %v518
      %v520 = vmul.f32 %v473, 1.442695
      %v521 = vpow.pop %v520
      %v522 = vmul.f32 %v474, 1.442695
      %v523 = vpow.pop %v522
      %v524 = vmul.f32 %v475, 1.442695
      %v525 = vpow.pop %v524
      %v526 = vmul.f32 %v476, 1.442695
      %v527 = vpow.pop %v526
      %v528 = vmul.f32 %v477, 1.442695
      %v529 = vpow.pop %v528
      %v530 = vmul.f32 %v478, 1.442695
      %v531 = vpow.pop %v530
      %v532 = vmul.f32 %v479, 1.442695
      %v533 = vpow.pop %v532
      %v534 = vmul.f32 %v480, 1.442695
      %v535 = vpow.pop %v534
      %v536 = vmul.f32 %v481, 1.442695
      %v537 = vpow.pop %v536
      %v538 = vmul.f32 %v482, 1.442695
      %v539 = vpow.pop %v538
      %v540 = vmul.f32 %v483, 1.442695
      %v541 = vpow.pop %v540
      %v542 = vmul.f32 %v484, 1.442695
      %v543 = vpow.pop %v542
      %v544 = vmul.f32 %v485, 1.442695
      %v545 = vpow.pop %v544
      %v546 = vmul.f32 %v486, 1.442695
      %v547 = vpow.pop %v546
      %v548 = vmul.f32 %v487, 1.442695
      %v549 = vpow.pop %v548
      %v550 = vmul.f32 %v488, 1.442695
      %v551 = vpow.pop %v550
      %v552 = vmul.f32 %v489, 1.442695
      %v553 = vpow.pop %v552
      %v554 = vadd.f32 %v491, 1.0
      %v555 = vadd.f32 %v493, 1.0
      %v556 = vadd.f32 %v495, 1.0
      %v557 = vadd.f32 %v497, 1.0
      %v558 = vadd.f32 %v499, 1.0
      %v559 = vadd.f32 %v501, 1.0
      %v560 = vadd.f32 %v503, 1.0
      %v561 = vadd.f32 %v505, 1.0
      %v562 = vadd.f32 %v507, 1.0
      %v563 = vadd.f32 %v509, 1.0
      %v564 = vadd.f32 %v511, 1.0
      %v565 = vadd.f32 %v513, 1.0
      %v566 = vadd.f32 %v515, 1.0
      %v567 = vadd.f32 %v517, 1.0
      %v568 = vadd.f32 %v519, 1.0
      %v569 = vadd.f32 %v521, 1.0
      %v570 = vadd.f32 %v523, 1.0
      %v571 = vadd.f32 %v525, 1.0
      %v572 = vadd.f32 %v527, 1.0
      %v573 = vadd.f32 %v529, 1.0
      %v574 = vadd.f32 %v531, 1.0
      %v575 = vadd.f32 %v533, 1.0
      %v576 = vadd.f32 %v535, 1.0
      %v577 = vadd.f32 %v537, 1.0
      %v578 = vadd.f32 %v539, 1.0
      %v579 = vadd.f32 %v541, 1.0
      %v580 = vadd.f32 %v543, 1.0
      %v581 = vadd.f32 %v545, 1.0
      %v582 = vadd.f32 %v547, 1.0
      %v583 = vadd.f32 %v549, 1.0
      %v584 = vadd.f32 %v551, 1.0
      %v585 = vadd.f32 %v553, 1.0
      %v586 = vrcp.pop %v554
      %v587 = vmul.f32 %v554, %v586
      %v588 = vsub.f32 1.0, %v587
      %v589 = vmul.f32 %v586, %v588
      %v590 = vadd.f32 %v586, %v589
      %vm591 = vweird.f32 %v554
      %vm592 = vweird.f32 %v586
      %vm593 = vmor %vm591, %vm592
      %v594 = vsel %vm593, %v586, %v590
      %v595 = vand.u32 2147483647, %v554
      %vm596 = vcmp.eq.f32.partialorder %v595, 8.507059e+37
      %v597 = vand.u32 %v554, 2147483648
      %v598 = vor.u32 1.1754944e-38, %v597
      %v599 = vsel %vm596, %v598, %v594
      %v600 = vmul.f32 1.0, %v599
      %v601 = vrcp.pop %v555
      %v602 = vmul.f32 %v555, %v601
      %v603 = vsub.f32 1.0, %v602
      %v604 = vmul.f32 %v601, %v603
      %v605 = vadd.f32 %v601, %v604
      %vm606 = vweird.f32 %v555
      %vm607 = vweird.f32 %v601
      %vm608 = vmor %vm606, %vm607
      %v609 = vsel %vm608, %v601, %v605
      %v610 = vand.u32 2147483647, %v555
      %vm611 = vcmp.eq.f32.partialorder %v610, 8.507059e+37
      %v612 = vand.u32 %v555, 2147483648
      %v613 = vor.u32 1.1754944e-38, %v612
      %v614 = vsel %vm611, %v613, %v609
      %v615 = vmul.f32 1.0, %v614
      %v616 = vrcp.pop %v556
      %v617 = vmul.f32 %v556, %v616
      %v618 = vsub.f32 1.0, %v617
      %v619 = vmul.f32 %v616, %v618
      %v620 = vadd.f32 %v616, %v619
      %vm621 = vweird.f32 %v556
      %vm622 = vweird.f32 %v616
      %vm623 = vmor %vm621, %vm622
      %v624 = vsel %vm623, %v616, %v620
      %v625 = vand.u32 2147483647, %v556
      %vm626 = vcmp.eq.f32.partialorder %v625, 8.507059e+37
      %v627 = vand.u32 %v556, 2147483648
      %v628 = vor.u32 1.1754944e-38, %v627
      %v629 = vsel %vm626, %v628, %v624
      %v630 = vmul.f32 1.0, %v629
      %v631 = vrcp.pop %v557
      %v632 = vmul.f32 %v557, %v631
      %v633 = vsub.f32 1.0, %v632
      %v634 = vmul.f32 %v631, %v633
      %v635 = vadd.f32 %v631, %v634
      %vm636 = vweird.f32 %v557
      %vm637 = vweird.f32 %v631
      %vm638 = vmor %vm636, %vm637
      %v639 = vsel %vm638, %v631, %v635
      %v640 = vand.u32 2147483647, %v557
      %vm641 = vcmp.eq.f32.partialorder %v640, 8.507059e+37
      %v642 = vand.u32 %v557, 2147483648
      %v643 = vor.u32 1.1754944e-38, %v642
      %v644 = vsel %vm641, %v643, %v639
      %v645 = vmul.f32 1.0, %v644
      %v646 = vrcp.pop %v558
      %v647 = vmul.f32 %v558, %v646
      %v648 = vsub.f32 1.0, %v647
      %v649 = vmul.f32 %v646, %v648
      %v650 = vadd.f32 %v646, %v649
      %vm651 = vweird.f32 %v558
      %vm652 = vweird.f32 %v646
      %vm653 = vmor %vm651, %vm652
      %v654 = vsel %vm653, %v646, %v650
      %v655 = vand.u32 2147483647, %v558
      %vm656 = vcmp.eq.f32.partialorder %v655, 8.507059e+37
      %v657 = vand.u32 %v558, 2147483648
      %v658 = vor.u32 1.1754944e-38, %v657
      %v659 = vsel %vm656, %v658, %v654
      %v660 = vmul.f32 1.0, %v659
      %v661 = vrcp.pop %v559
      %v662 = vmul.f32 %v559, %v661
      %v663 = vsub.f32 1.0, %v662
      %v664 = vmul.f32 %v661, %v663
      %v665 = vadd.f32 %v661, %v664
      %vm666 = vweird.f32 %v559
      %vm667 = vweird.f32 %v661
      %vm668 = vmor %vm666, %vm667
      %v669 = vsel %vm668, %v661, %v665
      %v670 = vand.u32 2147483647, %v559
      %vm671 = vcmp.eq.f32.partialorder %v670, 8.507059e+37
      %v672 = vand.u32 %v559, 2147483648
      %v673 = vor.u32 1.1754944e-38, %v672
      %v674 = vsel %vm671, %v673, %v669
      %v675 = vmul.f32 1.0, %v674
      %v676 = vrcp.pop %v560
      %v677 = vmul.f32 %v560, %v676
      %v678 = vsub.f32 1.0, %v677
      %v679 = vmul.f32 %v676, %v678
      %v680 = vadd.f32 %v676, %v679
      %vm681 = vweird.f32 %v560
      %vm682 = vweird.f32 %v676
      %vm683 = vmor %vm681, %vm682
      %v684 = vsel %vm683, %v676, %v680
      %v685 = vand.u32 2147483647, %v560
      %vm686 = vcmp.eq.f32.partialorder %v685, 8.507059e+37
      %v687 = vand.u32 %v560, 2147483648
      %v688 = vor.u32 1.1754944e-38, %v687
      %v689 = vsel %vm686, %v688, %v684
      %v690 = vmul.f32 1.0, %v689
      %v691 = vrcp.pop %v561
      %v692 = vmul.f32 %v561, %v691
      %v693 = vsub.f32 1.0, %v692
      %v694 = vmul.f32 %v691, %v693
      %v695 = vadd.f32 %v691, %v694
      %vm696 = vweird.f32 %v561
      %vm697 = vweird.f32 %v691
      %vm698 = vmor %vm696, %vm697
      %v699 = vsel %vm698, %v691, %v695
      %v700 = vand.u32 2147483647, %v561
      %vm701 = vcmp.eq.f32.partialorder %v700, 8.507059e+37
      %v702 = vand.u32 %v561, 2147483648
      %v703 = vor.u32 1.1754944e-38, %v702
      %v704 = vsel %vm701, %v703, %v699
      %v705 = vmul.f32 1.0, %v704
      %v706 = vrcp.pop %v562
      %v707 = vmul.f32 %v562, %v706
      %v708 = vsub.f32 1.0, %v707
      %v709 = vmul.f32 %v706, %v708
      %v710 = vadd.f32 %v706, %v709
      %vm711 = vweird.f32 %v562
      %vm712 = vweird.f32 %v706
      %vm713 = vmor %vm711, %vm712
      %v714 = vsel %vm713, %v706, %v710
      %v715 = vand.u32 2147483647, %v562
      %vm716 = vcmp.eq.f32.partialorder %v715, 8.507059e+37
      %v717 = vand.u32 %v562, 2147483648
      %v718 = vor.u32 1.1754944e-38, %v717
      %v719 = vsel %vm716, %v718, %v714
      %v720 = vmul.f32 1.0, %v719
      %v721 = vrcp.pop %v563
      %v722 = vmul.f32 %v563, %v721
      %v723 = vsub.f32 1.0, %v722
      %v724 = vmul.f32 %v721, %v723
      %v725 = vadd.f32 %v721, %v724
      %vm726 = vweird.f32 %v563
      %vm727 = vweird.f32 %v721
      %vm728 = vmor %vm726, %vm727
      %v729 = vsel %vm728, %v721, %v725
      %v730 = vand.u32 2147483647, %v563
      %vm731 = vcmp.eq.f32.partialorder %v730, 8.507059e+37
      %v732 = vand.u32 %v563, 2147483648
      %v733 = vor.u32 1.1754944e-38, %v732
      %v734 = vsel %vm731, %v733, %v729
      %v735 = vmul.f32 1.0, %v734
      %v736 = vrcp.pop %v564
      %v737 = vmul.f32 %v564, %v736
      %v738 = vsub.f32 1.0, %v737
      %v739 = vmul.f32 %v736, %v738
      %v740 = vadd.f32 %v736, %v739
      %vm741 = vweird.f32 %v564
      %vm742 = vweird.f32 %v736
      %vm743 = vmor %vm741, %vm742
      %v744 = vsel %vm743, %v736, %v740
      %v745 = vand.u32 2147483647, %v564
      %vm746 = vcmp.eq.f32.partialorder %v745, 8.507059e+37
      %v747 = vand.u32 %v564, 2147483648
      %v748 = vor.u32 1.1754944e-38, %v747
      %v749 = vsel %vm746, %v748, %v744
      %v750 = vmul.f32 1.0, %v749
      %v751 = vrcp.pop %v565
      %v752 = vmul.f32 %v565, %v751
      %v753 = vsub.f32 1.0, %v752
      %v754 = vmul.f32 %v751, %v753
      %v755 = vadd.f32 %v751, %v754
      %vm756 = vweird.f32 %v565
      %vm757 = vweird.f32 %v751
      %vm758 = vmor %vm756, %vm757
      %v759 = vsel %vm758, %v751, %v755
      %v760 = vand.u32 2147483647, %v565
      %vm761 = vcmp.eq.f32.partialorder %v760, 8.507059e+37
      %v762 = vand.u32 %v565, 2147483648
      %v763 = vor.u32 1.1754944e-38, %v762
      %v764 = vsel %vm761, %v763, %v759
      %v765 = vmul.f32 1.0, %v764
      %v766 = vrcp.pop %v566
      %v767 = vmul.f32 %v566, %v766
      %v768 = vsub.f32 1.0, %v767
      %v769 = vmul.f32 %v766, %v768
      %v770 = vadd.f32 %v766, %v769
      %vm771 = vweird.f32 %v566
      %vm772 = vweird.f32 %v766
      %vm773 = vmor %vm771, %vm772
      %v774 = vsel %vm773, %v766, %v770
      %v775 = vand.u32 2147483647, %v566
      %vm776 = vcmp.eq.f32.partialorder %v775, 8.507059e+37
      %v777 = vand.u32 %v566, 2147483648
      %v778 = vor.u32 1.1754944e-38, %v777
      %v779 = vsel %vm776, %v778, %v774
      %v780 = vmul.f32 1.0, %v779
      %v781 = vrcp.pop %v567
      %v782 = vmul.f32 %v567, %v781
      %v783 = vsub.f32 1.0, %v782
      %v784 = vmul.f32 %v781, %v783
      %v785 = vadd.f32 %v781, %v784
      %vm786 = vweird.f32 %v567
      %vm787 = vweird.f32 %v781
      %vm788 = vmor %vm786, %vm787
      %v789 = vsel %vm788, %v781, %v785
      %v790 = vand.u32 2147483647, %v567
      %vm791 = vcmp.eq.f32.partialorder %v790, 8.507059e+37
      %v792 = vand.u32 %v567, 2147483648
      %v793 = vor.u32 1.1754944e-38, %v792
      %v794 = vsel %vm791, %v793, %v789
      %v795 = vmul.f32 1.0, %v794
      %v796 = vrcp.pop %v568
      %v797 = vmul.f32 %v568, %v796
      %v798 = vsub.f32 1.0, %v797
      %v799 = vmul.f32 %v796, %v798
      %v800 = vadd.f32 %v796, %v799
      %vm801 = vweird.f32 %v568
      %vm802 = vweird.f32 %v796
      %vm803 = vmor %vm801, %vm802
      %v804 = vsel %vm803, %v796, %v800
      %v805 = vand.u32 2147483647, %v568
      %vm806 = vcmp.eq.f32.partialorder %v805, 8.507059e+37
      %v807 = vand.u32 %v568, 2147483648
      %v808 = vor.u32 1.1754944e-38, %v807
      %v809 = vsel %vm806, %v808, %v804
      %v810 = vmul.f32 1.0, %v809
      %v811 = vrcp.pop %v569
      %v812 = vmul.f32 %v569, %v811
      %v813 = vsub.f32 1.0, %v812
      %v814 = vmul.f32 %v811, %v813
      %v815 = vadd.f32 %v811, %v814
      %vm816 = vweird.f32 %v569
      %vm817 = vweird.f32 %v811
      %vm818 = vmor %vm816, %vm817
      %v819 = vsel %vm818, %v811, %v815
      %v820 = vand.u32 2147483647, %v569
      %vm821 = vcmp.eq.f32.partialorder %v820, 8.507059e+37
      %v822 = vand.u32 %v569, 2147483648
      %v823 = vor.u32 1.1754944e-38, %v822
      %v824 = vsel %vm821, %v823, %v819
      %v825 = vmul.f32 1.0, %v824
      %v826 = vrcp.pop %v570
      %v827 = vmul.f32 %v570, %v826
      %v828 = vsub.f32 1.0, %v827
      %v829 = vmul.f32 %v826, %v828
      %v830 = vadd.f32 %v826, %v829
      %vm831 = vweird.f32 %v570
      %vm832 = vweird.f32 %v826
      %vm833 = vmor %vm831, %vm832
      %v834 = vsel %vm833, %v826, %v830
      %v835 = vand.u32 2147483647, %v570
      %vm836 = vcmp.eq.f32.partialorder %v835, 8.507059e+37
      %v837 = vand.u32 %v570, 2147483648
      %v838 = vor.u32 1.1754944e-38, %v837
      %v839 = vsel %vm836, %v838, %v834
      %v840 = vmul.f32 1.0, %v839
      %v841 = vrcp.pop %v571
      %v842 = vmul.f32 %v571, %v841
      %v843 = vsub.f32 1.0, %v842
      %v844 = vmul.f32 %v841, %v843
      %v845 = vadd.f32 %v841, %v844
      %vm846 = vweird.f32 %v571
      %vm847 = vweird.f32 %v841
      %vm848 = vmor %vm846, %vm847
      %v849 = vsel %vm848, %v841, %v845
      %v850 = vand.u32 2147483647, %v571
      %vm851 = vcmp.eq.f32.partialorder %v850, 8.507059e+37
      %v852 = vand.u32 %v571, 2147483648
      %v853 = vor.u32 1.1754944e-38, %v852
      %v854 = vsel %vm851, %v853, %v849
      %v855 = vmul.f32 1.0, %v854
      %v856 = vrcp.pop %v572
      %v857 = vmul.f32 %v572, %v856
      %v858 = vsub.f32 1.0, %v857
      %v859 = vmul.f32 %v856, %v858
      %v860 = vadd.f32 %v856, %v859
      %vm861 = vweird.f32 %v572
      %vm862 = vweird.f32 %v856
      %vm863 = vmor %vm861, %vm862
      %v864 = vsel %vm863, %v856, %v860
      %v865 = vand.u32 2147483647, %v572
      %vm866 = vcmp.eq.f32.partialorder %v865, 8.507059e+37
      %v867 = vand.u32 %v572, 2147483648
      %v868 = vor.u32 1.1754944e-38, %v867
      %v869 = vsel %vm866, %v868, %v864
      %v870 = vmul.f32 1.0, %v869
      %v871 = vrcp.pop %v573
      %v872 = vmul.f32 %v573, %v871
      %v873 = vsub.f32 1.0, %v872
      %v874 = vmul.f32 %v871, %v873
      %v875 = vadd.f32 %v871, %v874
      %vm876 = vweird.f32 %v573
      %vm877 = vweird.f32 %v871
      %vm878 = vmor %vm876, %vm877
      %v879 = vsel %vm878, %v871, %v875
      %v880 = vand.u32 2147483647, %v573
      %vm881 = vcmp.eq.f32.partialorder %v880, 8.507059e+37
      %v882 = vand.u32 %v573, 2147483648
      %v883 = vor.u32 1.1754944e-38, %v882
      %v884 = vsel %vm881, %v883, %v879
      %v885 = vmul.f32 1.0, %v884
      %v886 = vrcp.pop %v574
      %v887 = vmul.f32 %v574, %v886
      %v888 = vsub.f32 1.0, %v887
      %v889 = vmul.f32 %v886, %v888
      %v890 = vadd.f32 %v886, %v889
      %vm891 = vweird.f32 %v574
      %vm892 = vweird.f32 %v886
      %vm893 = vmor %vm891, %vm892
      %v894 = vsel %vm893, %v886, %v890
      %v895 = vand.u32 2147483647, %v574
      %vm896 = vcmp.eq.f32.partialorder %v895, 8.507059e+37
      %v897 = vand.u32 %v574, 2147483648
      %v898 = vor.u32 1.1754944e-38, %v897
      %v899 = vsel %vm896, %v898, %v894
      %v900 = vmul.f32 1.0, %v899
      %v901 = vrcp.pop %v575
      %v902 = vmul.f32 %v575, %v901
      %v903 = vsub.f32 1.0, %v902
      %v904 = vmul.f32 %v901, %v903
      %v905 = vadd.f32 %v901, %v904
      %vm906 = vweird.f32 %v575
      %vm907 = vweird.f32 %v901
      %vm908 = vmor %vm906, %vm907
      %v909 = vsel %vm908, %v901, %v905
      %v910 = vand.u32 2147483647, %v575
      %vm911 = vcmp.eq.f32.partialorder %v910, 8.507059e+37
      %v912 = vand.u32 %v575, 2147483648
      %v913 = vor.u32 1.1754944e-38, %v912
      %v914 = vsel %vm911, %v913, %v909
      %v915 = vmul.f32 1.0, %v914
      %v916 = vrcp.pop %v576
      %v917 = vmul.f32 %v576, %v916
      %v918 = vsub.f32 1.0, %v917
      %v919 = vmul.f32 %v916, %v918
      %v920 = vadd.f32 %v916, %v919
      %vm921 = vweird.f32 %v576
      %vm922 = vweird.f32 %v916
      %vm923 = vmor %vm921, %vm922
      %v924 = vsel %vm923, %v916, %v920
      %v925 = vand.u32 2147483647, %v576
      %vm926 = vcmp.eq.f32.partialorder %v925, 8.507059e+37
      %v927 = vand.u32 %v576, 2147483648
      %v928 = vor.u32 1.1754944e-38, %v927
      %v929 = vsel %vm926, %v928, %v924
      %v930 = vmul.f32 1.0, %v929
      %v931 = vrcp.pop %v577
      %v932 = vmul.f32 %v577, %v931
      %v933 = vsub.f32 1.0, %v932
      %v934 = vmul.f32 %v931, %v933
      %v935 = vadd.f32 %v931, %v934
      %vm936 = vweird.f32 %v577
      %vm937 = vweird.f32 %v931
      %vm938 = vmor %vm936, %vm937
      %v939 = vsel %vm938, %v931, %v935
      %v940 = vand.u32 2147483647, %v577
      %vm941 = vcmp.eq.f32.partialorder %v940, 8.507059e+37
      %v942 = vand.u32 %v577, 2147483648
      %v943 = vor.u32 1.1754944e-38, %v942
      %v944 = vsel %vm941, %v943, %v939
      %v945 = vmul.f32 1.0, %v944
      %v946 = vrcp.pop %v578
      %v947 = vmul.f32 %v578, %v946
      %v948 = vsub.f32 1.0, %v947
      %v949 = vmul.f32 %v946, %v948
      %v950 = vadd.f32 %v946, %v949
      %vm951 = vweird.f32 %v578
      %vm952 = vweird.f32 %v946
      %vm953 = vmor %vm951, %vm952
      %v954 = vsel %vm953, %v946, %v950
      %v955 = vand.u32 2147483647, %v578
      %vm956 = vcmp.eq.f32.partialorder %v955, 8.507059e+37
      %v957 = vand.u32 %v578, 2147483648
      %v958 = vor.u32 1.1754944e-38, %v957
      %v959 = vsel %vm956, %v958, %v954
      %v960 = vmul.f32 1.0, %v959
      %v961 = vrcp.pop %v579
      %v962 = vmul.f32 %v579, %v961
      %v963 = vsub.f32 1.0, %v962
      %v964 = vmul.f32 %v961, %v963
      %v965 = vadd.f32 %v961, %v964
      %vm966 = vweird.f32 %v579
      %vm967 = vweird.f32 %v961
      %vm968 = vmor %vm966, %vm967
      %v969 = vsel %vm968, %v961, %v965
      %v970 = vand.u32 2147483647, %v579
      %vm971 = vcmp.eq.f32.partialorder %v970, 8.507059e+37
      %v972 = vand.u32 %v579, 2147483648
      %v973 = vor.u32 1.1754944e-38, %v972
      %v974 = vsel %vm971, %v973, %v969
      %v975 = vmul.f32 1.0, %v974
      %v976 = vrcp.pop %v580
      %v977 = vmul.f32 %v580, %v976
      %v978 = vsub.f32 1.0, %v977
      %v979 = vmul.f32 %v976, %v978
      %v980 = vadd.f32 %v976, %v979
      %vm981 = vweird.f32 %v580
      %vm982 = vweird.f32 %v976
      %vm983 = vmor %vm981, %vm982
      %v984 = vsel %vm983, %v976, %v980
      %v985 = vand.u32 2147483647, %v580
      %vm986 = vcmp.eq.f32.partialorder %v985, 8.507059e+37
      %v987 = vand.u32 %v580, 2147483648
      %v988 = vor.u32 1.1754944e-38, %v987
      %v989 = vsel %vm986, %v988, %v984
      %v990 = vmul.f32 1.0, %v989
      %v991 = vrcp.pop %v581
      %v992 = vmul.f32 %v581, %v991
      %v993 = vsub.f32 1.0, %v992
      %v994 = vmul.f32 %v991, %v993
      %v995 = vadd.f32 %v991, %v994
      %vm996 = vweird.f32 %v581
      %vm997 = vweird.f32 %v991
      %vm998 = vmor %vm996, %vm997
      %v999 = vsel %vm998, %v991, %v995
      %v1000 = vand.u32 2147483647, %v581
      %vm1001 = vcmp.eq.f32.partialorder %v1000, 8.507059e+37
      %v1002 = vand.u32 %v581, 2147483648
      %v1003 = vor.u32 1.1754944e-38, %v1002
      %v1004 = vsel %vm1001, %v1003, %v999
      %v1005 = vmul.f32 1.0, %v1004
      %v1006 = vrcp.pop %v582
      %v1007 = vmul.f32 %v582, %v1006
      %v1008 = vsub.f32 1.0, %v1007
      %v1009 = vmul.f32 %v1006, %v1008
      %v1010 = vadd.f32 %v1006, %v1009
      %vm1011 = vweird.f32 %v582
      %vm1012 = vweird.f32 %v1006
      %vm1013 = vmor %vm1011, %vm1012
      %v1014 = vsel %vm1013, %v1006, %v1010
      %v1015 = vand.u32 2147483647, %v582
      %vm1016 = vcmp.eq.f32.partialorder %v1015, 8.507059e+37
      %v1017 = vand.u32 %v582, 2147483648
      %v1018 = vor.u32 1.1754944e-38, %v1017
      %v1019 = vsel %vm1016, %v1018, %v1014
      %v1020 = vmul.f32 1.0, %v1019
      %v1021 = vrcp.pop %v583
      %v1022 = vmul.f32 %v583, %v1021
      %v1023 = vsub.f32 1.0, %v1022
      %v1024 = vmul.f32 %v1021, %v1023
      %v1025 = vadd.f32 %v1021, %v1024
      %vm1026 = vweird.f32 %v583
      %vm1027 = vweird.f32 %v1021
      %vm1028 = vmor %vm1026, %vm1027
      %v1029 = vsel %vm1028, %v1021, %v1025
      %v1030 = vand.u32 2147483647, %v583
      %vm1031 = vcmp.eq.f32.partialorder %v1030, 8.507059e+37
      %v1032 = vand.u32 %v583, 2147483648
      %v1033 = vor.u32 1.1754944e-38, %v1032
      %v1034 = vsel %vm1031, %v1033, %v1029
      %v1035 = vmul.f32 1.0, %v1034
      %v1036 = vrcp.pop %v584
      %v1037 = vmul.f32 %v584, %v1036
      %v1038 = vsub.f32 1.0, %v1037
      %v1039 = vmul.f32 %v1036, %v1038
      %v1040 = vadd.f32 %v1036, %v1039
      %vm1041 = vweird.f32 %v584
      %vm1042 = vweird.f32 %v1036
      %vm1043 = vmor %vm1041, %vm1042
      %v1044 = vsel %vm1043, %v1036, %v1040
      %v1045 = vand.u32 2147483647, %v584
      %vm1046 = vcmp.eq.f32.partialorder %v1045, 8.507059e+37
      %v1047 = vand.u32 %v584, 2147483648
      %v1048 = vor.u32 1.1754944e-38, %v1047
      %v1049 = vsel %vm1046, %v1048, %v1044
      %v1050 = vmul.f32 1.0, %v1049
      %v1051 = vrcp.pop %v585
      %v1052 = vmul.f32 %v585, %v1051
      %v1053 = vsub.f32 1.0, %v1052
      %v1054 = vmul.f32 %v1051, %v1053
      %v1055 = vadd.f32 %v1051, %v1054
      %vm1056 = vweird.f32 %v585
      %vm1057 = vweird.f32 %v1051
      %vm1058 = vmor %vm1056, %vm1057
      %v1059 = vsel %vm1058, %v1051, %v1055
      %v1060 = vand.u32 2147483647, %v585
      %vm1061 = vcmp.eq.f32.partialorder %v1060, 8.507059e+37
      %v1062 = vand.u32 %v585, 2147483648
      %v1063 = vor.u32 1.1754944e-38, %v1062
      %v1064 = vsel %vm1061, %v1063, %v1059
      %v1065 = vmul.f32 1.0, %v1064
      %v1066 = vsel %vm457, %v600, %v374
      %v1067 = vsel %vm457, %v615, %v376
      %v1068 = vsel %vm457, %v630, %v379
      %v1069 = vsel %vm457, %v645, %v381
      %v1070 = vsel %vm457, %v660, %v384
      %v1071 = vsel %vm457, %v675, %v386
      %v1072 = vsel %vm457, %v690, %v389
      %v1073 = vsel %vm457, %v705, %v391
      %v1074 = vsel %vm457, %v720, %v394
      %v1075 = vsel %vm457, %v735, %v396
      %v1076 = vsel %vm457, %v750, %v399
      %v1077 = vsel %vm457, %v765, %v401
      %v1078 = vsel %vm457, %v780, %v404
      %v1079 = vsel %vm457, %v795, %v406
      %v1080 = vsel %vm457, %v810, %v409
      %v1081 = vsel %vm457, %v825, %v411
      %v1082 = vsel %vm457, %v840, %v414
      %v1083 = vsel %vm457, %v855, %v416
      %v1084 = vsel %vm457, %v870, %v419
      %v1085 = vsel %vm457, %v885, %v421
      %v1086 = vsel %vm457, %v900, %v424
      %v1087 = vsel %vm457, %v915, %v426
      %v1088 = vsel %vm457, %v930, %v429
      %v1089 = vsel %vm457, %v945, %v431
      %v1090 = vsel %vm457, %v960, %v434
      %v1091 = vsel %vm457, %v975, %v436
      %v1092 = vsel %vm457, %v990, %v439
      %v1093 = vsel %vm457, %v1005, %v441
      %v1094 = vsel %vm457, %v1020, %v444
      %v1095 = vsel %vm457, %v1035, %v446
      %v1096 = vsel %vm457, %v1050, %v449
      %v1097 = vsel %vm457, %v1065, %v451
      %1098 = vst [vmem:[%s172] sm:$0xff] %v1066
      %1099 = vst [vmem:[%s172 + $0x8] sm:$0xff] %v1067
      %1100 = vst [vmem:[%s172 + $0x10] sm:$0xff] %v1068
      %1101 = vst [vmem:[%s172 + $0x18] sm:$0xff] %v1069
      %1102 = vst [vmem:[%s172 + $0x20] sm:$0xff] %v1070
      %1103 = vst [vmem:[%s172 + $0x28] sm:$0xff] %v1071
      %1104 = vst [vmem:[%s172 + $0x30] sm:$0xff] %v1072
      %1105 = vst [vmem:[%s172 + $0x38] sm:$0xff] %v1073
      %1106 = vst [vmem:[%s172 + $0x40] sm:$0xff] %v1074
      %1107 = vst [vmem:[%s172 + $0x48] sm:$0xff] %v1075
      %1108 = vst [vmem:[%s172 + $0x50] sm:$0xff] %v1076
      %1109 = vst [vmem:[%s172 + $0x58] sm:$0xff] %v1077
      %1110 = vst [vmem:[%s172 + $0x60] sm:$0xff] %v1078
      %1111 = vst [vmem:[%s172 + $0x68] sm:$0xff] %v1079
      %1112 = vst [vmem:[%s172 + $0x70] sm:$0xff] %v1080
      %1113 = vst [vmem:[%s172 + $0x78] sm:$0xff] %v1081
      %1114 = vst [vmem:[%s172 + $0x80] sm:$0xff] %v1082
      %1115 = vst [vmem:[%s172 + $0x88] sm:$0xff] %v1083
      %1116 = vst [vmem:[%s172 + $0x90] sm:$0xff] %v1084
      %1117 = vst [vmem:[%s172 + $0x98] sm:$0xff] %v1085
      %1118 = vst [vmem:[%s172 + $0xa0] sm:$0xff] %v1086
      %1119 = vst [vmem:[%s172 + $0xa8] sm:$0xff] %v1087
      %1120 = vst [vmem:[%s172 + $0xb0] sm:$0xff] %v1088
      %1121 = vst [vmem:[%s172 + $0xb8] sm:$0xff] %v1089
      %1122 = vst [vmem:[%s172 + $0xc0] sm:$0xff] %v1090
      %1123 = vst [vmem:[%s172 + $0xc8] sm:$0xff] %v1091
      %1124 = vst [vmem:[%s172 + $0xd0] sm:$0xff] %v1092
      %1125 = vst [vmem:[%s172 + $0xd8] sm:$0xff] %v1093
      %1126 = vst [vmem:[%s172 + $0xe0] sm:$0xff] %v1094
      %1127 = vst [vmem:[%s172 + $0xe8] sm:$0xff] %v1095
      %1128 = vst [vmem:[%s172 + $0xf0] sm:$0xff] %v1096
      %1129 = vst [vmem:[%s172 + $0xf8] sm:$0xff] %v1097
      %s1130 = smul.u32 32, %s14
      %p1131 = scmp.lt.s32.totalorder %s1130, 63
      %s1132 = scalar_select %p1131, %s1130, 63
      %s1133 = smul.addr %s1132, 8
      %s1134 = scalar_lea.vmem %s3, %s1133
      // Predicated region
      $region33: #{deformable_cnv2_forward.3} parent=31 // pred_check
        %p1135 = pneg %p100
      $region34: #{deformable_cnv2_forward.3} parent=31 // pred_check_branch
        %1137 = sbr.rel (%p1135) target = $region36
      $region35: #{deformable_cnv2_forward.3} parent=31 // pred_region
        %s1138 = smul.u32 32, %s14
      $region36: #{deformable_cnv2_forward.3} parent=31 // pred_fallthru
        _
    $region32: #{deformable_cnv2_forward.3} parent=5 // pred_fallthru
      _
    %p1139 = scmp.le.s32.totalorder 2, %s9
    // Predicated region
    $region37: #{deformable_cnv2_forward.3} parent=5 // pred_check
      %p1140 = pneg %p1139
    $region38: #{deformable_cnv2_forward.3} parent=5 // pred_check_branch
      %1142 = sbr.rel (%p1140) target = $region40
    $region39: #{deformable_cnv2_forward.3} parent=5 // pred_region
      %s1143 = ssub.s32 %s9, 2
      // Predicated region
      $region41: #{deformable_cnv2_forward.3} parent=39 // pred_check
        %p1144 = pneg %p106
      $region42: #{deformable_cnv2_forward.3} parent=39 // pred_check_branch
        %1146 = sbr.rel (%p1144) target = $region44
      $region43: #{deformable_cnv2_forward.3} parent=39 // pred_region
        %s1147 = smul.u32 32, %s15
        %p1148 = scmp.lt.s32.totalorder %s1147, 63
        %s1149 = scalar_select %p1148, %s1147, 63
        %s1150 = smul.addr %s1149, 8
        %s1151 = scalar_lea.vmem %s3, %s1150
      $region44: #{deformable_cnv2_forward.3} parent=39 // pred_fallthru
        _
    $region40: #{deformable_cnv2_forward.3} parent=5 // pred_fallthru
      _
  $region6: #{deformable_cnv2_forward.3} parent=0 // loop_footer
    %s13 = sadd.s32 1, %s9
  $region7: #{deformable_cnv2_forward.3} parent=0 // loop_footer_branch
    %8 = sbr.rel target = $region3
  $region8: #{deformable_cnv2_forward.3} parent=0 // loop_exit
    _

// kernel: deformable_cnv2_forward.4
$region0: #{deformable_cnv2_forward.4}
  #allocation0 [shape = 'u32[]', space=smem, size = 0x4, offset = 0x4, fixed_abs, tag = 'smem constant byte address 0x4 - core index']
  #allocation1 [shape = 'u32[72,128]{1,0:T(1,128)}', space=vmem, size = 0x9000, scoped, tag = 'internal scratch']
  %s0 = inlined_call_operand.vmem [shape: bf16[512,36], index: 0, kind: input, shape index: {}]
  %s1 = inlined_call_operand.vmem [shape: bf16[36,128], index: 1, kind: input, shape index: {}]
  %s2 = inlined_call_operand.vmem [shape: bf16[512,128], index: 2, kind: output, shape index: {0}]
  %s3 = inlined_call_operand.vmem [shape: f32[2,1,128], index: 3, kind: output, shape index: {1}]
  %s4 = inlined_call_operand.vmem [shape: f32[2,1,128], index: 4, kind: output, shape index: {2}]
  %5 = xla_tuple %s2, %s3, %s4
  %s6 = sld [smem:[#allocation0]]
  $region57: #{deformable_cnv2_forward.4} parent=0
    _
  %s8 = ssub.s32 1, %s6
  %s9 = scalar_select 0, %s8, %s6
  loop: start=0, step=1, limit=4
  $region2: #{deformable_cnv2_forward.4} parent=0 // loop_pre_header
    _
  $region3: #{deformable_cnv2_forward.4} parent=0 // loop_header
    %s11 = sphi 0, %s15
    %p12 = scmp.ge.s32.totalorder %s11, 4
    %s21 = sphi 0, %s23
    %s24 = sphi 0, %s21
    %s25 = sphi 0, %s24
    %s41 = sphi 0, %s25
    %s45 = sphi 0, %s45
    %s47 = sphi 0, %s45
    %s48 = sphi 0, %s47
    %s62 = sphi 0, %s48
    %s68 = sphi 0, %s70
    %s71 = sphi 0, %s68
    %s72 = sphi 0, %s71
    %s88 = sphi 0, %s72
    %s94 = sphi 0, %s96
    %s97 = sphi 0, %s94
    %s98 = sphi 0, %s97
    %s114 = sphi 0, %s98
    %s120 = sphi 0, %s122
    %s123 = sphi 0, %s120
    %s124 = sphi 0, %s123
    %s140 = sphi 0, %s124
  $region4: #{deformable_cnv2_forward.4} parent=0 // loop_header_branch
    %14 = sbr.rel (%p12) target = $region8
  $region5: #{deformable_cnv2_forward.4} parent=0 // loop_body
    %s16 = ssub.s32 %s11, 1
    %s17 = ssub.s32 %s11, 2
    %s18 = sadd.s32 %s11, 1
    %s19 = ssub.s32 %s11, %s18
    %p20 = scmp.eq.s32.totalorder %s19, 0
    %s22 = sadd.s32 %s21, 1
    %s23 = scalar_select %p20, %s21, %s22
    %p26 = pneg %p20
    %p27 = scmp.eq.s32.totalorder %s11, 1
    %p28 = por %p26, %p27
    %p29 = scmp.ne.s32.totalorder %s21, %s24
    %p30 = scmp.eq.s32.totalorder %s11, 0
    %p31 = por %p29, %p30
    %p32 = scmp.ne.s32.totalorder %s21, %s24
    %p33 = scmp.eq.s32.totalorder %s16, 1
    %p34 = por %p32, %p33
    %p35 = scmp.ne.s32.totalorder %s24, %s25
    %p36 = scmp.eq.s32.totalorder %s16, 0
    %p37 = por %p35, %p36
    %p38 = scmp.ne.s32.totalorder %s24, %s25
    %p39 = scmp.eq.s32.totalorder %s17, 1
    %p40 = por %p38, %p39
    %p42 = scmp.ne.s32.totalorder %s25, %s41
    %p43 = scmp.eq.s32.totalorder %s17, 0
    %p44 = por %p42, %p43
    %s46 = sadd.s32 %s45, 1
    %p49 = scmp.eq.s32.totalorder %s11, 1
    %p50 = scmp.ne.s32.totalorder %s45, %s47
    %p51 = scmp.eq.s32.totalorder %s11, 0
    %p52 = por %p50, %p51
    %p53 = scmp.ne.s32.totalorder %s45, %s47
    %p54 = scmp.eq.s32.totalorder %s16, 1
    %p55 = por %p53, %p54
    %p56 = scmp.ne.s32.totalorder %s47, %s48
    %p57 = scmp.eq.s32.totalorder %s16, 0
    %p58 = por %p56, %p57
    %p59 = scmp.ne.s32.totalorder %s47, %s48
    %p60 = scmp.eq.s32.totalorder %s17, 1
    %p61 = por %p59, %p60
    %p63 = scmp.ne.s32.totalorder %s48, %s62
    %p64 = scmp.eq.s32.totalorder %s17, 0
    %p65 = por %p63, %p64
    %s66 = ssub.s32 %s11, %s18
    %p67 = scmp.eq.s32.totalorder %s66, 0
    %s69 = sadd.s32 %s68, 1
    %s70 = scalar_select %p67, %s68, %s69
    %p73 = pneg %p67
    %p74 = scmp.eq.s32.totalorder %s11, 1
    %p75 = por %p73, %p74
    %p76 = scmp.ne.s32.totalorder %s68, %s71
    %p77 = scmp.eq.s32.totalorder %s11, 0
    %p78 = por %p76, %p77
    %p79 = scmp.ne.s32.totalorder %s68, %s71
    %p80 = scmp.eq.s32.totalorder %s16, 1
    %p81 = por %p79, %p80
    %p82 = scmp.ne.s32.totalorder %s71, %s72
    %p83 = scmp.eq.s32.totalorder %s16, 0
    %p84 = por %p82, %p83
    %p85 = scmp.ne.s32.totalorder %s71, %s72
    %p86 = scmp.eq.s32.totalorder %s17, 1
    %p87 = por %p85, %p86
    %p89 = scmp.ne.s32.totalorder %s72, %s88
    %p90 = scmp.eq.s32.totalorder %s17, 0
    %p91 = por %p89, %p90
    %s92 = ssub.s32 %s11, %s18
    %p93 = scmp.eq.s32.totalorder %s92, 0
    %s95 = sadd.s32 %s94, 1
    %s96 = scalar_select %p93, %s94, %s95
    %p99 = pneg %p93
    %p100 = scmp.eq.s32.totalorder %s11, 1
    %p101 = por %p99, %p100
    %p102 = scmp.ne.s32.totalorder %s94, %s97
    %p103 = scmp.eq.s32.totalorder %s11, 0
    %p104 = por %p102, %p103
    %p105 = scmp.ne.s32.totalorder %s94, %s97
    %p106 = scmp.eq.s32.totalorder %s16, 1
    %p107 = por %p105, %p106
    %p108 = scmp.ne.s32.totalorder %s97, %s98
    %p109 = scmp.eq.s32.totalorder %s16, 0
    %p110 = por %p108, %p109
    %p111 = scmp.ne.s32.totalorder %s97, %s98
    %p112 = scmp.eq.s32.totalorder %s17, 1
    %p113 = por %p111, %p112
    %p115 = scmp.ne.s32.totalorder %s98, %s114
    %p116 = scmp.eq.s32.totalorder %s17, 0
    %p117 = por %p115, %p116
    %s118 = ssub.s32 %s11, %s18
    %p119 = scmp.eq.s32.totalorder %s118, 0
    %s121 = sadd.s32 %s120, 1
    %s122 = scalar_select %p119, %s120, %s121
    %p125 = pneg %p119
    %p126 = scmp.eq.s32.totalorder %s11, 1
    %p127 = por %p125, %p126
    %p128 = scmp.ne.s32.totalorder %s120, %s123
    %p129 = scmp.eq.s32.totalorder %s11, 0
    %p130 = por %p128, %p129
    %p131 = scmp.ne.s32.totalorder %s120, %s123
    %p132 = scmp.eq.s32.totalorder %s16, 1
    %p133 = por %p131, %p132
    %p134 = scmp.ne.s32.totalorder %s123, %s124
    %p135 = scmp.eq.s32.totalorder %s16, 0
    %p136 = por %p134, %p135
    %p137 = scmp.ne.s32.totalorder %s123, %s124
    %p138 = scmp.eq.s32.totalorder %s17, 1
    %p139 = por %p137, %p138
    %p141 = scmp.ne.s32.totalorder %s124, %s140
    %p142 = scmp.eq.s32.totalorder %s17, 0
    %p143 = por %p141, %p142
    %p144 = scmp.le.s32.totalorder 1, %s11
    %p145 = scmp.lt.s32.totalorder %s11, 3
    %p146 = pnand %p144, %p145
    %p147 = pneg %p146
    // Predicated region
    $region9: #{deformable_cnv2_forward.4} parent=5 // pred_check
      _
    $region10: #{deformable_cnv2_forward.4} parent=5 // pred_check_branch
      %149 = sbr.rel (%p146) target = $region12
    $region11: #{deformable_cnv2_forward.4} parent=5 // pred_region
      %s150 = ssub.s32 %s11, 1
      // Predicated region
      $region13: #{deformable_cnv2_forward.4} parent=11 // pred_check
        %p151 = pneg %p58
      $region14: #{deformable_cnv2_forward.4} parent=11 // pred_check_branch
        %153 = sbr.rel (%p151) target = $region16
      $region15: #{deformable_cnv2_forward.4} parent=11 // pred_region
        _
      $region16: #{deformable_cnv2_forward.4} parent=11 // pred_fallthru
        _
    $region12: #{deformable_cnv2_forward.4} parent=5 // pred_fallthru
      _
    %p154 = scmp.lt.s32.totalorder %s11, 2
    // Predicated region
    $region17: #{deformable_cnv2_forward.4} parent=5 // pred_check
      %p155 = pneg %p154
    $region18: #{deformable_cnv2_forward.4} parent=5 // pred_check_branch
      %157 = sbr.rel (%p155) target = $region20
    $region19: #{deformable_cnv2_forward.4} parent=5 // pred_region
      // Predicated region
      $region21: #{deformable_cnv2_forward.4} parent=19 // pred_check
        %p158 = pneg %p31
      $region22: #{deformable_cnv2_forward.4} parent=19 // pred_check_branch
        %160 = sbr.rel (%p158) target = $region24
      $region23: #{deformable_cnv2_forward.4} parent=19 // pred_region
        %s161 = smul.u32 32, %s11
        %p162 = scmp.lt.s32.totalorder %s161, 63
        %s163 = scalar_select %p162, %s161, 63
        %s164 = smul.addr %s163, 4
        %s165 = scalar_lea.vmem %s0, %s164
        %s166 = smul.u32 32, %s11
      $region24: #{deformable_cnv2_forward.4} parent=19 // pred_fallthru
        _
    $region20: #{deformable_cnv2_forward.4} parent=5 // pred_fallthru
      _
    %p167 = scmp.le.s32.totalorder 1, %s11
    %p168 = scmp.lt.s32.totalorder %s11, 3
    %p169 = pnand %p167, %p168
    %p170 = pneg %p169
    // Predicated region
    $region25: #{deformable_cnv2_forward.4} parent=5 // pred_check
      _
    $region26: #{deformable_cnv2_forward.4} parent=5 // pred_check_branch
      %172 = sbr.rel (%p169) target = $region28
    $region27: #{deformable_cnv2_forward.4} parent=5 // pred_region
      %s173 = ssub.s32 %s11, 1
      %s174 = smul.u32 32, %s16
      %p175 = scmp.lt.s32.totalorder %s174, 63
      %s176 = scalar_select %p175, %s174, 63
      %s177 = smul.addr %s176, 4
      %s178 = scalar_lea.vmem %s0, %s177
      %p179 = pneg %p37
      %p180 = pneg %p34
      %p181 = pneg %p58
      %p182 = pneg %p55
      %p183 = pneg %p84
      %p184 = pneg %p81
      %s185 = smul.u32 32, %s16
      %p186 = scmp.lt.s32.totalorder %s185, 63
      %s187 = scalar_select %p186, %s185, 63
      %s188 = smul.addr %s187, 4
      %s189 = scalar_lea.vmem %s2, %s188
      %p190 = pneg %p110
      %p191 = pneg %p107
      %p192 = scmp.lt.s32.totalorder %s16, 1
      %s193 = scalar_select %p192, %s16, 1
      %s194 = scalar_lea.vmem %s3, %s193
      %p195 = pneg %p136
      %p196 = pneg %p133
      %p197 = scmp.lt.s32.totalorder %s16, 1
      %s198 = scalar_select %p197, %s16, 1
      %s199 = scalar_lea.vmem %s4, %s198
      %s200 = smul.u32 32, %s16
      %p201 = scmp.lt.s32.totalorder %s200, 63
      %s202 = scalar_select %p201, %s200, 63
      %s203 = smul.addr %s202, 4
      %s204 = scalar_lea.vmem %s0, %s203
      %s205 = smul.u32 32, %s16
      %s206 = smul.u32 32, %s16
      %p207 = scmp.lt.s32.totalorder %s206, 63
      %s208 = scalar_select %p207, %s206, 63
      %s209 = smul.addr %s208, 4
      %s210 = scalar_lea.vmem %s2, %s209
      %s211 = smul.u32 32, %s16
      %p212 = scmp.lt.s32.totalorder %s16, 1
      %s213 = scalar_select %p212, %s16, 1
      %s214 = scalar_lea.vmem %s3, %s213
      %p215 = scmp.lt.s32.totalorder %s16, 1
      %s216 = scalar_select %p215, %s16, 1
      %s217 = scalar_lea.vmem %s4, %s216
      %v219 = vld [vmem:[%s204] sm:$0xf]
      %v220 = vld [vmem:[%s204 + $0x4] sm:$0xf]
      %v221 = vld [vmem:[%s204 + $0x8] sm:$0xf]
      %v222 = vld [vmem:[%s204 + $0xc] sm:$0xf]
      %v223 = vld [vmem:[%s204 + $0x10] sm:$0xf]
      %v224 = vld [vmem:[%s204 + $0x14] sm:$0xf]
      %v225 = vld [vmem:[%s204 + $0x18] sm:$0xf]
      %v226 = vld [vmem:[%s204 + $0x1c] sm:$0xf]
      %v227 = vld [vmem:[%s204 + $0x20] sm:$0xf]
      %v228 = vld [vmem:[%s204 + $0x24] sm:$0xf]
      %v229 = vld [vmem:[%s204 + $0x28] sm:$0xf]
      %v230 = vld [vmem:[%s204 + $0x2c] sm:$0xf]
      %v231 = vld [vmem:[%s204 + $0x30] sm:$0xf]
      %v232 = vld [vmem:[%s204 + $0x34] sm:$0xf]
      %v233 = vld [vmem:[%s204 + $0x38] sm:$0xf]
      %v234 = vld [vmem:[%s204 + $0x3c] sm:$0xf]
      %v235 = vld [vmem:[%s204 + $0x40] sm:$0xf]
      %v236 = vld [vmem:[%s204 + $0x44] sm:$0xf]
      %v237 = vld [vmem:[%s204 + $0x48] sm:$0xf]
      %v238 = vld [vmem:[%s204 + $0x4c] sm:$0xf]
      %v239 = vld [vmem:[%s204 + $0x50] sm:$0xf]
      %v240 = vld [vmem:[%s204 + $0x54] sm:$0xf]
      %v241 = vld [vmem:[%s204 + $0x58] sm:$0xf]
      %v242 = vld [vmem:[%s204 + $0x5c] sm:$0xf]
      %v243 = vld [vmem:[%s204 + $0x60] sm:$0xf]
      %v244 = vld [vmem:[%s204 + $0x64] sm:$0xf]
      %v245 = vld [vmem:[%s204 + $0x68] sm:$0xf]
      %v246 = vld [vmem:[%s204 + $0x6c] sm:$0xf]
      %v247 = vld [vmem:[%s204 + $0x70] sm:$0xf]
      %v248 = vld [vmem:[%s204 + $0x74] sm:$0xf]
      %v249 = vld [vmem:[%s204 + $0x78] sm:$0xf]
      %v250 = vld [vmem:[%s204 + $0x7c] sm:$0xf]
      %v251 = vld [vmem:[%s1] sm:$0xf]
      %v252 = vld [vmem:[%s1 + $0x4] sm:$0xf]
      %v253 = vld [vmem:[%s1 + $0x8] sm:$0xf]
      %v254 = vld [vmem:[%s1 + $0xc] sm:$0xf]
      %v255 = vld [vmem:[%s1 + $0x10] sm:$0x3]
      %v288 = vunpack.c.l.b16 %v219
      %v289 = vunpack.c.l.b16 %v220
      %v290 = vunpack.c.l.b16 %v221
      %v291 = vunpack.c.l.b16 %v222
      %v292 = vunpack.c.l.b16 %v223
      %v293 = vunpack.c.l.b16 %v224
      %v294 = vunpack.c.l.b16 %v225
      %v295 = vunpack.c.l.b16 %v226
      %v296 = vunpack.c.l.b16 %v227
      %v297 = vunpack.c.l.b16 %v228
      %v298 = vunpack.c.l.b16 %v229
      %v299 = vunpack.c.l.b16 %v230
      %v300 = vunpack.c.l.b16 %v231
      %v301 = vunpack.c.l.b16 %v232
      %v302 = vunpack.c.l.b16 %v233
      %v303 = vunpack.c.l.b16 %v234
      %v304 = vunpack.c.l.b16 %v235
      %v305 = vunpack.c.l.b16 %v236
      %v306 = vunpack.c.l.b16 %v237
      %v307 = vunpack.c.l.b16 %v238
      %v308 = vunpack.c.l.b16 %v239
      %v309 = vunpack.c.l.b16 %v240
      %v310 = vunpack.c.l.b16 %v241
      %v311 = vunpack.c.l.b16 %v242
      %v312 = vunpack.c.l.b16 %v243
      %v313 = vunpack.c.l.b16 %v244
      %v314 = vunpack.c.l.b16 %v245
      %v315 = vunpack.c.l.b16 %v246
      %v316 = vunpack.c.l.b16 %v247
      %v317 = vunpack.c.l.b16 %v248
      %v318 = vunpack.c.l.b16 %v249
      %v319 = vunpack.c.l.b16 %v250
      %v320 = vpack.c.b16 %v289, %v288
      %v321 = vpack.c.b16 %v291, %v290
      %v322 = vpack.c.b16 %v293, %v292
      %v323 = vpack.c.b16 %v295, %v294
      %v324 = vpack.c.b16 %v297, %v296
      %v325 = vpack.c.b16 %v299, %v298
      %v326 = vpack.c.b16 %v301, %v300
      %v327 = vpack.c.b16 %v303, %v302
      %v328 = vpack.c.b16 %v305, %v304
      %v329 = vpack.c.b16 %v307, %v306
      %v330 = vpack.c.b16 %v309, %v308
      %v331 = vpack.c.b16 %v311, %v310
      %v332 = vpack.c.b16 %v313, %v312
      %v333 = vpack.c.b16 %v315, %v314
      %v334 = vpack.c.b16 %v317, %v316
      %v335 = vpack.c.b16 %v319, %v318
      %v341 = vunpack.c.l.b16 %v251
      %v342 = vunpack.c.l.b16 %v252
      %v343 = vunpack.c.l.b16 %v253
      %v344 = vunpack.c.l.b16 %v254
      %v345 = vunpack.c.l.b16 %v255
      %v346 = vpack.c.b16 %v342, %v341
      %v347 = vpack.c.b16 %v344, %v343
      %v348 = vpack.c.b16 %v345, %v345
      %vm351 = vcmask 293888
      %v353 = vsel %vm351, %v320, 0
      %v356 = vsel %vm351, %v321, 0
      %v359 = vsel %vm351, %v322, 0
      %v362 = vsel %vm351, %v323, 0
      %v365 = vsel %vm351, %v324, 0
      %v368 = vsel %vm351, %v325, 0
      %v371 = vsel %vm351, %v326, 0
      %v374 = vsel %vm351, %v327, 0
      %v377 = vsel %vm351, %v328, 0
      %v380 = vsel %vm351, %v329, 0
      %v383 = vsel %vm351, %v330, 0
      %v386 = vsel %vm351, %v331, 0
      %v389 = vsel %vm351, %v332, 0
      %v392 = vsel %vm351, %v333, 0
      %v395 = vsel %vm351, %v334, 0
      %v398 = vsel %vm351, %v335, 0
      %vm400 = vcmask 1041408
      %v402 = vsel %vm400, %v348, 0
      %404 = vmatpush.bf16.msra.mxu0 0
      %405 = vmatpush.bf16.msra.mxu0 0
      %406 = vmatpush.bf16.msra.mxu0 0
      %407 = vmatpush.bf16.msra.mxu0 0
      %408 = vmatpush.bf16.msra.mxu0 0
      %409 = vmatpush.bf16.msra.mxu0 %v402
      %410 = vmatpush.bf16.msra.mxu0 %v347
      %411 = vmatpush.bf16.msra.mxu0 %v346
      %412 = vmatmul.bf16.gmra.mxu0 %v353
      %v413 = vpop.f32.mrf.mxu0
      %v414 = vadd.f32 0.0, %v413
      %v415 = vpop.f32.mrf.mxu0
      %v416 = vadd.f32 0.0, %v415
      %417 = vmatmul.bf16.gmra.mxu0 %v356
      %v418 = vpop.f32.mrf.mxu0
      %v419 = vadd.f32 0.0, %v418
      %v420 = vpop.f32.mrf.mxu0
      %v421 = vadd.f32 0.0, %v420
      %422 = vmatmul.bf16.gmra.mxu0 %v359
      %v423 = vpop.f32.mrf.mxu0
      %v424 = vadd.f32 0.0, %v423
      %v425 = vpop.f32.mrf.mxu0
      %v426 = vadd.f32 0.0, %v425
      %427 = vmatmul.bf16.gmra.mxu0 %v362
      %v428 = vpop.f32.mrf.mxu0
      %v429 = vadd.f32 0.0, %v428
      %v430 = vpop.f32.mrf.mxu0
      %v431 = vadd.f32 0.0, %v430
      %432 = vmatmul.bf16.gmra.mxu0 %v365
      %v433 = vpop.f32.mrf.mxu0
      %v434 = vadd.f32 0.0, %v433
      %v435 = vpop.f32.mrf.mxu0
      %v436 = vadd.f32 0.0, %v435
      %437 = vmatmul.bf16.gmra.mxu0 %v368
      %v438 = vpop.f32.mrf.mxu0
      %v439 = vadd.f32 0.0, %v438
      %v440 = vpop.f32.mrf.mxu0
      %v441 = vadd.f32 0.0, %v440
      %442 = vmatmul.bf16.gmra.mxu0 %v371
      %v443 = vpop.f32.mrf.mxu0
      %v444 = vadd.f32 0.0, %v443
      %v445 = vpop.f32.mrf.mxu0
      %v446 = vadd.f32 0.0, %v445
      %447 = vmatmul.bf16.gmra.mxu0 %v374
      %v448 = vpop.f32.mrf.mxu0
      %v449 = vadd.f32 0.0, %v448
      %v450 = vpop.f32.mrf.mxu0
      %v451 = vadd.f32 0.0, %v450
      %452 = vmatmul.bf16.gmra.mxu0 %v377
      %v453 = vpop.f32.mrf.mxu0
      %v454 = vadd.f32 0.0, %v453
      %v455 = vpop.f32.mrf.mxu0
      %v456 = vadd.f32 0.0, %v455
      %457 = vmatmul.bf16.gmra.mxu0 %v380
      %v458 = vpop.f32.mrf.mxu0
      %v459 = vadd.f32 0.0, %v458
      %v460 = vpop.f32.mrf.mxu0
      %v461 = vadd.f32 0.0, %v460
      %462 = vmatmul.bf16.gmra.mxu0 %v383
      %v463 = vpop.f32.mrf.mxu0
      %v464 = vadd.f32 0.0, %v463
      %v465 = vpop.f32.mrf.mxu0
      %v466 = vadd.f32 0.0, %v465
      %467 = vmatmul.bf16.gmra.mxu0 %v386
      %v468 = vpop.f32.mrf.mxu0
      %v469 = vadd.f32 0.0, %v468
      %v470 = vpop.f32.mrf.mxu0
      %v471 = vadd.f32 0.0, %v470
      %472 = vmatmul.bf16.gmra.mxu0 %v389
      %v473 = vpop.f32.mrf.mxu0
      %v474 = vadd.f32 0.0, %v473
      %v475 = vpop.f32.mrf.mxu0
      %v476 = vadd.f32 0.0, %v475
      %477 = vmatmul.bf16.gmra.mxu0 %v392
      %v478 = vpop.f32.mrf.mxu0
      %v479 = vadd.f32 0.0, %v478
      %v480 = vpop.f32.mrf.mxu0
      %v481 = vadd.f32 0.0, %v480
      %482 = vmatmul.bf16.gmra.mxu0 %v395
      %v483 = vpop.f32.mrf.mxu0
      %v484 = vadd.f32 0.0, %v483
      %v485 = vpop.f32.mrf.mxu0
      %v486 = vadd.f32 0.0, %v485
      %487 = vmatmul.bf16.gmra.mxu0 %v398
      %v488 = vpop.f32.mrf.mxu0
      %v489 = vadd.f32 0.0, %v488
      %v490 = vpop.f32.mrf.mxu0
      %v491 = vadd.f32 0.0, %v490
      %492 = vdwg.mxu0
      %v493 = vpack.c.bf16 %v414, %v414
      %v494 = vpack.c.bf16 %v416, %v416
      %v495 = vpack.c.bf16 %v419, %v419
      %v496 = vpack.c.bf16 %v421, %v421
      %v497 = vpack.c.bf16 %v424, %v424
      %v498 = vpack.c.bf16 %v426, %v426
      %v499 = vpack.c.bf16 %v429, %v429
      %v500 = vpack.c.bf16 %v431, %v431
      %v501 = vpack.c.bf16 %v434, %v434
      %v502 = vpack.c.bf16 %v436, %v436
      %v503 = vpack.c.bf16 %v439, %v439
      %v504 = vpack.c.bf16 %v441, %v441
      %v505 = vpack.c.bf16 %v444, %v444
      %v506 = vpack.c.bf16 %v446, %v446
      %v507 = vpack.c.bf16 %v449, %v449
      %v508 = vpack.c.bf16 %v451, %v451
      %v509 = vpack.c.bf16 %v454, %v454
      %v510 = vpack.c.bf16 %v456, %v456
      %v511 = vpack.c.bf16 %v459, %v459
      %v512 = vpack.c.bf16 %v461, %v461
      %v513 = vpack.c.bf16 %v464, %v464
      %v514 = vpack.c.bf16 %v466, %v466
      %v515 = vpack.c.bf16 %v469, %v469
      %v516 = vpack.c.bf16 %v471, %v471
      %v517 = vpack.c.bf16 %v474, %v474
      %v518 = vpack.c.bf16 %v476, %v476
      %v519 = vpack.c.bf16 %v479, %v479
      %v520 = vpack.c.bf16 %v481, %v481
      %v521 = vpack.c.bf16 %v484, %v484
      %v522 = vpack.c.bf16 %v486, %v486
      %v523 = vpack.c.bf16 %v489, %v489
      %v524 = vpack.c.bf16 %v491, %v491
      %525 = vst [vmem:[%s210] sm:$0xf] %v493
      %526 = vst [vmem:[%s210 + $0x4] sm:$0xf] %v494
      %527 = vst [vmem:[%s210 + $0x8] sm:$0xf] %v495
      %528 = vst [vmem:[%s210 + $0xc] sm:$0xf] %v496
      %529 = vst [vmem:[%s210 + $0x10] sm:$0xf] %v497
      %530 = vst [vmem:[%s210 + $0x14] sm:$0xf] %v498
      %531 = vst [vmem:[%s210 + $0x18] sm:$0xf] %v499
      %532 = vst [vmem:[%s210 + $0x1c] sm:$0xf] %v500
      %533 = vst [vmem:[%s210 + $0x20] sm:$0xf] %v501
      %534 = vst [vmem:[%s210 + $0x24] sm:$0xf] %v502
      %535 = vst [vmem:[%s210 + $0x28] sm:$0xf] %v503
      %536 = vst [vmem:[%s210 + $0x2c] sm:$0xf] %v504
      %537 = vst [vmem:[%s210 + $0x30] sm:$0xf] %v505
      %538 = vst [vmem:[%s210 + $0x34] sm:$0xf] %v506
      %539 = vst [vmem:[%s210 + $0x38] sm:$0xf] %v507
      %540 = vst [vmem:[%s210 + $0x3c] sm:$0xf] %v508
      %541 = vst [vmem:[%s210 + $0x40] sm:$0xf] %v509
      %542 = vst [vmem:[%s210 + $0x44] sm:$0xf] %v510
      %543 = vst [vmem:[%s210 + $0x48] sm:$0xf] %v511
      %544 = vst [vmem:[%s210 + $0x4c] sm:$0xf] %v512
      %545 = vst [vmem:[%s210 + $0x50] sm:$0xf] %v513
      %546 = vst [vmem:[%s210 + $0x54] sm:$0xf] %v514
      %547 = vst [vmem:[%s210 + $0x58] sm:$0xf] %v515
      %548 = vst [vmem:[%s210 + $0x5c] sm:$0xf] %v516
      %549 = vst [vmem:[%s210 + $0x60] sm:$0xf] %v517
      %550 = vst [vmem:[%s210 + $0x64] sm:$0xf] %v518
      %551 = vst [vmem:[%s210 + $0x68] sm:$0xf] %v519
      %552 = vst [vmem:[%s210 + $0x6c] sm:$0xf] %v520
      %553 = vst [vmem:[%s210 + $0x70] sm:$0xf] %v521
      %554 = vst [vmem:[%s210 + $0x74] sm:$0xf] %v522
      %555 = vst [vmem:[%s210 + $0x78] sm:$0xf] %v523
      %556 = vst [vmem:[%s210 + $0x7c] sm:$0xf] %v524
      %v557 = vadd.f32 %v414, %v416
      %v558 = vadd.f32 %v557, %v419
      %v559 = vadd.f32 %v558, %v421
      %v560 = vadd.f32 %v559, %v424
      %v561 = vadd.f32 %v560, %v426
      %v562 = vadd.f32 %v561, %v429
      %v563 = vadd.f32 %v562, %v431
      %v564 = vadd.f32 %v563, %v434
      %v565 = vadd.f32 %v564, %v436
      %v566 = vadd.f32 %v565, %v439
      %v567 = vadd.f32 %v566, %v441
      %v568 = vadd.f32 %v567, %v444
      %v569 = vadd.f32 %v568, %v446
      %v570 = vadd.f32 %v569, %v449
      %v571 = vadd.f32 %v570, %v451
      %v572 = vadd.f32 %v571, %v454
      %v573 = vadd.f32 %v572, %v456
      %v574 = vadd.f32 %v573, %v459
      %v575 = vadd.f32 %v574, %v461
      %v576 = vadd.f32 %v575, %v464
      %v577 = vadd.f32 %v576, %v466
      %v578 = vadd.f32 %v577, %v469
      %v579 = vadd.f32 %v578, %v471
      %v580 = vadd.f32 %v579, %v474
      %v581 = vadd.f32 %v580, %v476
      %v582 = vadd.f32 %v581, %v479
      %v583 = vadd.f32 %v582, %v481
      %v584 = vadd.f32 %v583, %v484
      %v585 = vadd.f32 %v584, %v486
      %v586 = vadd.f32 %v585, %v489
      %v587 = vadd.f32 %v586, %v491
      %v588 = vrot.slane %v587, 4
      %v589 = vadd.f32 %v587, %v588
      %v590 = vrot.slane %v589, 2
      %v591 = vadd.f32 %v589, %v590
      %v592 = vrot.slane %v591, 1
      %v593 = vadd.f32 %v591, %v592
      %594 = vst [vmem:[%s214] sm:$0x1] %v593
      %v595 = vmul.f32 %v414, %v414
      %v596 = vmul.f32 %v416, %v416
      %v597 = vmul.f32 %v419, %v419
      %v598 = vmul.f32 %v421, %v421
      %v599 = vmul.f32 %v424, %v424
      %v600 = vmul.f32 %v426, %v426
      %v601 = vmul.f32 %v429, %v429
      %v602 = vmul.f32 %v431, %v431
      %v603 = vmul.f32 %v434, %v434
      %v604 = vmul.f32 %v436, %v436
      %v605 = vmul.f32 %v439, %v439
      %v606 = vmul.f32 %v441, %v441
      %v607 = vmul.f32 %v444, %v444
      %v608 = vmul.f32 %v446, %v446
      %v609 = vmul.f32 %v449, %v449
      %v610 = vmul.f32 %v451, %v451
      %v611 = vmul.f32 %v454, %v454
      %v612 = vmul.f32 %v456, %v456
      %v613 = vmul.f32 %v459, %v459
      %v614 = vmul.f32 %v461, %v461
      %v615 = vmul.f32 %v464, %v464
      %v616 = vmul.f32 %v466, %v466
      %v617 = vmul.f32 %v469, %v469
      %v618 = vmul.f32 %v471, %v471
      %v619 = vmul.f32 %v474, %v474
      %v620 = vmul.f32 %v476, %v476
      %v621 = vmul.f32 %v479, %v479
      %v622 = vmul.f32 %v481, %v481
      %v623 = vmul.f32 %v484, %v484
      %v624 = vmul.f32 %v486, %v486
      %v625 = vmul.f32 %v489, %v489
      %v626 = vmul.f32 %v491, %v491
      %v627 = vadd.f32 %v595, %v596
      %v628 = vadd.f32 %v627, %v597
      %v629 = vadd.f32 %v628, %v598
      %v630 = vadd.f32 %v629, %v599
      %v631 = vadd.f32 %v630, %v600
      %v632 = vadd.f32 %v631, %v601
      %v633 = vadd.f32 %v632, %v602
      %v634 = vadd.f32 %v633, %v603
      %v635 = vadd.f32 %v634, %v604
      %v636 = vadd.f32 %v635, %v605
      %v637 = vadd.f32 %v636, %v606
      %v638 = vadd.f32 %v637, %v607
      %v639 = vadd.f32 %v638, %v608
      %v640 = vadd.f32 %v639, %v609
      %v641 = vadd.f32 %v640, %v610
      %v642 = vadd.f32 %v641, %v611
      %v643 = vadd.f32 %v642, %v612
      %v644 = vadd.f32 %v643, %v613
      %v645 = vadd.f32 %v644, %v614
      %v646 = vadd.f32 %v645, %v615
      %v647 = vadd.f32 %v646, %v616
      %v648 = vadd.f32 %v647, %v617
      %v649 = vadd.f32 %v648, %v618
      %v650 = vadd.f32 %v649, %v619
      %v651 = vadd.f32 %v650, %v620
      %v652 = vadd.f32 %v651, %v621
      %v653 = vadd.f32 %v652, %v622
      %v654 = vadd.f32 %v653, %v623
      %v655 = vadd.f32 %v654, %v624
      %v656 = vadd.f32 %v655, %v625
      %v657 = vadd.f32 %v656, %v626
      %v658 = vrot.slane %v657, 4
      %v659 = vadd.f32 %v657, %v658
      %v660 = vrot.slane %v659, 2
      %v661 = vadd.f32 %v659, %v660
      %v662 = vrot.slane %v661, 1
      %v663 = vadd.f32 %v661, %v662
      %664 = vst [vmem:[%s217] sm:$0x1] %v663
      %s665 = smul.u32 32, %s16
      %p666 = scmp.lt.s32.totalorder %s665, 63
      %s667 = scalar_select %p666, %s665, 63
      %s668 = smul.addr %s667, 4
      %s669 = scalar_lea.vmem %s2, %s668
      %p670 = scmp.lt.s32.totalorder %s16, 1
      %s671 = scalar_select %p670, %s16, 1
      %s672 = scalar_lea.vmem %s3, %s671
      %p673 = scmp.lt.s32.totalorder %s16, 1
      %s674 = scalar_select %p673, %s16, 1
      %s675 = scalar_lea.vmem %s4, %s674
      // Predicated region
      $region29: #{deformable_cnv2_forward.4} parent=27 // pred_check
        %p676 = pneg %p81
      $region30: #{deformable_cnv2_forward.4} parent=27 // pred_check_branch
        %678 = sbr.rel (%p676) target = $region32
      $region31: #{deformable_cnv2_forward.4} parent=27 // pred_region
        %s679 = smul.u32 32, %s16
      $region32: #{deformable_cnv2_forward.4} parent=27 // pred_fallthru
        _
      // Predicated region
      $region33: #{deformable_cnv2_forward.4} parent=27 // pred_check
        %p680 = pneg %p107
      $region34: #{deformable_cnv2_forward.4} parent=27 // pred_check_branch
        %682 = sbr.rel (%p680) target = $region36
      $region35: #{deformable_cnv2_forward.4} parent=27 // pred_region
        _
      $region36: #{deformable_cnv2_forward.4} parent=27 // pred_fallthru
        _
      // Predicated region
      $region37: #{deformable_cnv2_forward.4} parent=27 // pred_check
        %p683 = pneg %p133
      $region38: #{deformable_cnv2_forward.4} parent=27 // pred_check_branch
        %685 = sbr.rel (%p683) target = $region40
      $region39: #{deformable_cnv2_forward.4} parent=27 // pred_region
        _
      $region40: #{deformable_cnv2_forward.4} parent=27 // pred_fallthru
        _
    $region28: #{deformable_cnv2_forward.4} parent=5 // pred_fallthru
      _
    %p686 = scmp.le.s32.totalorder 2, %s11
    // Predicated region
    $region41: #{deformable_cnv2_forward.4} parent=5 // pred_check
      %p687 = pneg %p686
    $region42: #{deformable_cnv2_forward.4} parent=5 // pred_check_branch
      %689 = sbr.rel (%p687) target = $region44
    $region43: #{deformable_cnv2_forward.4} parent=5 // pred_region
      %s690 = ssub.s32 %s11, 2
      // Predicated region
      $region45: #{deformable_cnv2_forward.4} parent=43 // pred_check
        %p691 = pneg %p87
      $region46: #{deformable_cnv2_forward.4} parent=43 // pred_check_branch
        %693 = sbr.rel (%p691) target = $region48
      $region47: #{deformable_cnv2_forward.4} parent=43 // pred_region
        %s694 = smul.u32 32, %s17
        %p695 = scmp.lt.s32.totalorder %s694, 63
        %s696 = scalar_select %p695, %s694, 63
        %s697 = smul.addr %s696, 4
        %s698 = scalar_lea.vmem %s2, %s697
      $region48: #{deformable_cnv2_forward.4} parent=43 // pred_fallthru
        _
      // Predicated region
      $region49: #{deformable_cnv2_forward.4} parent=43 // pred_check
        %p699 = pneg %p113
      $region50: #{deformable_cnv2_forward.4} parent=43 // pred_check_branch
        %701 = sbr.rel (%p699) target = $region52
      $region51: #{deformable_cnv2_forward.4} parent=43 // pred_region
        %p702 = scmp.lt.s32.totalorder %s17, 1
        %s703 = scalar_select %p702, %s17, 1
        %s704 = scalar_lea.vmem %s3, %s703
      $region52: #{deformable_cnv2_forward.4} parent=43 // pred_fallthru
        _
      // Predicated region
      $region53: #{deformable_cnv2_forward.4} parent=43 // pred_check
        %p705 = pneg %p139
      $region54: #{deformable_cnv2_forward.4} parent=43 // pred_check_branch
        %707 = sbr.rel (%p705) target = $region56
      $region55: #{deformable_cnv2_forward.4} parent=43 // pred_region
        %p708 = scmp.lt.s32.totalorder %s17, 1
        %s709 = scalar_select %p708, %s17, 1
        %s710 = scalar_lea.vmem %s4, %s709
      $region56: #{deformable_cnv2_forward.4} parent=43 // pred_fallthru
        _
    $region44: #{deformable_cnv2_forward.4} parent=5 // pred_fallthru
      _
  $region6: #{deformable_cnv2_forward.4} parent=0 // loop_footer
    %s15 = sadd.s32 1, %s11
  $region7: #{deformable_cnv2_forward.4} parent=0 // loop_footer_branch
    %10 = sbr.rel target = $region3
  $region8: #{deformable_cnv2_forward.4} parent=0 // loop_exit
    _

// kernel: deformable_cnv2_forward.5
$region0: #{deformable_cnv2_forward.5}
  #allocation0 [shape = 'u32[]', space=smem, size = 0x4, offset = 0x4, fixed_abs, tag = 'smem constant byte address 0x4 - core index']
  #allocation1 [shape = 'u32[72,128]{1,0:T(1,128)}', space=vmem, size = 0x9000, scoped, tag = 'internal scratch']
  %s0 = inlined_call_operand.vmem [shape: bf16[512,128], index: 0, kind: input, shape index: {}, may-alias: {0,3}]
  %s1 = inlined_call_operand.vmem [shape: f32[1,128], index: 1, kind: input, shape index: {}]
  %s2 = inlined_call_operand.vmem [shape: f32[1,128], index: 2, kind: input, shape index: {}]
  %s3 = inlined_call_operand.vmem [shape: bf16[512,128], index: 3, kind: output, shape index: {}, may-alias: {0,3}]
  %s4 = sld [smem:[#allocation0]]
  $region45: #{deformable_cnv2_forward.5} parent=0
    _
  %s6 = ssub.s32 1, %s4
  %s7 = scalar_select 0, %s6, %s4
  loop: start=0, step=1, limit=4
  $region2: #{deformable_cnv2_forward.5} parent=0 // loop_pre_header
    _
  $region3: #{deformable_cnv2_forward.5} parent=0 // loop_header
    %s9 = sphi 0, %s13
    %p10 = scmp.ge.s32.totalorder %s9, 4
    %s19 = sphi 0, %s21
    %s22 = sphi 0, %s19
    %s23 = sphi 0, %s22
    %s39 = sphi 0, %s23
    %s43 = sphi 0, %s43
    %s45 = sphi 0, %s43
    %s46 = sphi 0, %s45
    %s60 = sphi 0, %s46
    %s64 = sphi 0, %s64
    %s66 = sphi 0, %s64
    %s67 = sphi 0, %s66
    %s81 = sphi 0, %s67
    %s87 = sphi 0, %s89
    %s90 = sphi 0, %s87
    %s91 = sphi 0, %s90
    %s107 = sphi 0, %s91
  $region4: #{deformable_cnv2_forward.5} parent=0 // loop_header_branch
    %12 = sbr.rel (%p10) target = $region8
  $region5: #{deformable_cnv2_forward.5} parent=0 // loop_body
    %s14 = ssub.s32 %s9, 1
    %s15 = ssub.s32 %s9, 2
    %s16 = sadd.s32 %s9, 1
    %s17 = ssub.s32 %s9, %s16
    %p18 = scmp.eq.s32.totalorder %s17, 0
    %s20 = sadd.s32 %s19, 1
    %s21 = scalar_select %p18, %s19, %s20
    %p24 = pneg %p18
    %p25 = scmp.eq.s32.totalorder %s9, 1
    %p26 = por %p24, %p25
    %p27 = scmp.ne.s32.totalorder %s19, %s22
    %p28 = scmp.eq.s32.totalorder %s9, 0
    %p29 = por %p27, %p28
    %p30 = scmp.ne.s32.totalorder %s19, %s22
    %p31 = scmp.eq.s32.totalorder %s14, 1
    %p32 = por %p30, %p31
    %p33 = scmp.ne.s32.totalorder %s22, %s23
    %p34 = scmp.eq.s32.totalorder %s14, 0
    %p35 = por %p33, %p34
    %p36 = scmp.ne.s32.totalorder %s22, %s23
    %p37 = scmp.eq.s32.totalorder %s15, 1
    %p38 = por %p36, %p37
    %p40 = scmp.ne.s32.totalorder %s23, %s39
    %p41 = scmp.eq.s32.totalorder %s15, 0
    %p42 = por %p40, %p41
    %s44 = sadd.s32 %s43, 1
    %p47 = scmp.eq.s32.totalorder %s9, 1
    %p48 = scmp.ne.s32.totalorder %s43, %s45
    %p49 = scmp.eq.s32.totalorder %s9, 0
    %p50 = por %p48, %p49
    %p51 = scmp.ne.s32.totalorder %s43, %s45
    %p52 = scmp.eq.s32.totalorder %s14, 1
    %p53 = por %p51, %p52
    %p54 = scmp.ne.s32.totalorder %s45, %s46
    %p55 = scmp.eq.s32.totalorder %s14, 0
    %p56 = por %p54, %p55
    %p57 = scmp.ne.s32.totalorder %s45, %s46
    %p58 = scmp.eq.s32.totalorder %s15, 1
    %p59 = por %p57, %p58
    %p61 = scmp.ne.s32.totalorder %s46, %s60
    %p62 = scmp.eq.s32.totalorder %s15, 0
    %p63 = por %p61, %p62
    %s65 = sadd.s32 %s64, 1
    %p68 = scmp.eq.s32.totalorder %s9, 1
    %p69 = scmp.ne.s32.totalorder %s64, %s66
    %p70 = scmp.eq.s32.totalorder %s9, 0
    %p71 = por %p69, %p70
    %p72 = scmp.ne.s32.totalorder %s64, %s66
    %p73 = scmp.eq.s32.totalorder %s14, 1
    %p74 = por %p72, %p73
    %p75 = scmp.ne.s32.totalorder %s66, %s67
    %p76 = scmp.eq.s32.totalorder %s14, 0
    %p77 = por %p75, %p76
    %p78 = scmp.ne.s32.totalorder %s66, %s67
    %p79 = scmp.eq.s32.totalorder %s15, 1
    %p80 = por %p78, %p79
    %p82 = scmp.ne.s32.totalorder %s67, %s81
    %p83 = scmp.eq.s32.totalorder %s15, 0
    %p84 = por %p82, %p83
    %s85 = ssub.s32 %s9, %s16
    %p86 = scmp.eq.s32.totalorder %s85, 0
    %s88 = sadd.s32 %s87, 1
    %s89 = scalar_select %p86, %s87, %s88
    %p92 = pneg %p86
    %p93 = scmp.eq.s32.totalorder %s9, 1
    %p94 = por %p92, %p93
    %p95 = scmp.ne.s32.totalorder %s87, %s90
    %p96 = scmp.eq.s32.totalorder %s9, 0
    %p97 = por %p95, %p96
    %p98 = scmp.ne.s32.totalorder %s87, %s90
    %p99 = scmp.eq.s32.totalorder %s14, 1
    %p100 = por %p98, %p99
    %p101 = scmp.ne.s32.totalorder %s90, %s91
    %p102 = scmp.eq.s32.totalorder %s14, 0
    %p103 = por %p101, %p102
    %p104 = scmp.ne.s32.totalorder %s90, %s91
    %p105 = scmp.eq.s32.totalorder %s15, 1
    %p106 = por %p104, %p105
    %p108 = scmp.ne.s32.totalorder %s91, %s107
    %p109 = scmp.eq.s32.totalorder %s15, 0
    %p110 = por %p108, %p109
    %p111 = scmp.le.s32.totalorder 1, %s9
    %p112 = scmp.lt.s32.totalorder %s9, 3
    %p113 = pnand %p111, %p112
    %p114 = pneg %p113
    // Predicated region
    $region9: #{deformable_cnv2_forward.5} parent=5 // pred_check
      _
    $region10: #{deformable_cnv2_forward.5} parent=5 // pred_check_branch
      %116 = sbr.rel (%p113) target = $region12
    $region11: #{deformable_cnv2_forward.5} parent=5 // pred_region
      %s117 = ssub.s32 %s9, 1
      // Predicated region
      $region13: #{deformable_cnv2_forward.5} parent=11 // pred_check
        %p118 = pneg %p56
      $region14: #{deformable_cnv2_forward.5} parent=11 // pred_check_branch
        %120 = sbr.rel (%p118) target = $region16
      $region15: #{deformable_cnv2_forward.5} parent=11 // pred_region
        _
      $region16: #{deformable_cnv2_forward.5} parent=11 // pred_fallthru
        _
      // Predicated region
      $region17: #{deformable_cnv2_forward.5} parent=11 // pred_check
        %p121 = pneg %p77
      $region18: #{deformable_cnv2_forward.5} parent=11 // pred_check_branch
        %123 = sbr.rel (%p121) target = $region20
      $region19: #{deformable_cnv2_forward.5} parent=11 // pred_region
        _
      $region20: #{deformable_cnv2_forward.5} parent=11 // pred_fallthru
        _
    $region12: #{deformable_cnv2_forward.5} parent=5 // pred_fallthru
      _
    %p124 = scmp.lt.s32.totalorder %s9, 2
    // Predicated region
    $region21: #{deformable_cnv2_forward.5} parent=5 // pred_check
      %p125 = pneg %p124
    $region22: #{deformable_cnv2_forward.5} parent=5 // pred_check_branch
      %127 = sbr.rel (%p125) target = $region24
    $region23: #{deformable_cnv2_forward.5} parent=5 // pred_region
      // Predicated region
      $region25: #{deformable_cnv2_forward.5} parent=23 // pred_check
        %p128 = pneg %p29
      $region26: #{deformable_cnv2_forward.5} parent=23 // pred_check_branch
        %130 = sbr.rel (%p128) target = $region28
      $region27: #{deformable_cnv2_forward.5} parent=23 // pred_region
        %s131 = smul.u32 32, %s9
        %p132 = scmp.lt.s32.totalorder %s131, 63
        %s133 = scalar_select %p132, %s131, 63
        %s134 = smul.addr %s133, 4
        %s135 = scalar_lea.vmem %s0, %s134
        %s136 = smul.u32 32, %s9
      $region28: #{deformable_cnv2_forward.5} parent=23 // pred_fallthru
        _
    $region24: #{deformable_cnv2_forward.5} parent=5 // pred_fallthru
      _
    %p137 = scmp.le.s32.totalorder 1, %s9
    %p138 = scmp.lt.s32.totalorder %s9, 3
    %p139 = pnand %p137, %p138
    %p140 = pneg %p139
    // Predicated region
    $region29: #{deformable_cnv2_forward.5} parent=5 // pred_check
      _
    $region30: #{deformable_cnv2_forward.5} parent=5 // pred_check_branch
      %142 = sbr.rel (%p139) target = $region32
    $region31: #{deformable_cnv2_forward.5} parent=5 // pred_region
      %s143 = ssub.s32 %s9, 1
      %s144 = smul.u32 32, %s14
      %p145 = scmp.lt.s32.totalorder %s144, 63
      %s146 = scalar_select %p145, %s144, 63
      %s147 = smul.addr %s146, 4
      %s148 = scalar_lea.vmem %s0, %s147
      %p149 = pneg %p35
      %p150 = pneg %p32
      %p151 = pneg %p56
      %p152 = pneg %p53
      %p153 = pneg %p77
      %p154 = pneg %p74
      %p155 = pneg %p103
      %p156 = pneg %p100
      %s157 = smul.u32 32, %s14
      %p158 = scmp.lt.s32.totalorder %s157, 63
      %s159 = scalar_select %p158, %s157, 63
      %s160 = smul.addr %s159, 4
      %s161 = scalar_lea.vmem %s3, %s160
      %s162 = smul.u32 32, %s14
      %p163 = scmp.lt.s32.totalorder %s162, 63
      %s164 = scalar_select %p163, %s162, 63
      %s165 = smul.addr %s164, 4
      %s166 = scalar_lea.vmem %s0, %s165
      %s167 = smul.u32 32, %s14
      %s168 = smul.u32 32, %s14
      %p169 = scmp.lt.s32.totalorder %s168, 63
      %s170 = scalar_select %p169, %s168, 63
      %s171 = smul.addr %s170, 4
      %s172 = scalar_lea.vmem %s3, %s171
      %s173 = smul.u32 32, %s14
      %v174 = vld [vmem:[%s166] sm:$0xf]
      %v175 = vld [vmem:[%s166 + $0x4] sm:$0xf]
      %v176 = vld [vmem:[%s166 + $0x8] sm:$0xf]
      %v177 = vld [vmem:[%s166 + $0xc] sm:$0xf]
      %v178 = vld [vmem:[%s166 + $0x10] sm:$0xf]
      %v179 = vld [vmem:[%s166 + $0x14] sm:$0xf]
      %v180 = vld [vmem:[%s166 + $0x18] sm:$0xf]
      %v181 = vld [vmem:[%s166 + $0x1c] sm:$0xf]
      %v182 = vld [vmem:[%s166 + $0x20] sm:$0xf]
      %v183 = vld [vmem:[%s166 + $0x24] sm:$0xf]
      %v184 = vld [vmem:[%s166 + $0x28] sm:$0xf]
      %v185 = vld [vmem:[%s166 + $0x2c] sm:$0xf]
      %v186 = vld [vmem:[%s166 + $0x30] sm:$0xf]
      %v187 = vld [vmem:[%s166 + $0x34] sm:$0xf]
      %v188 = vld [vmem:[%s166 + $0x38] sm:$0xf]
      %v189 = vld [vmem:[%s166 + $0x3c] sm:$0xf]
      %v190 = vld [vmem:[%s166 + $0x40] sm:$0xf]
      %v191 = vld [vmem:[%s166 + $0x44] sm:$0xf]
      %v192 = vld [vmem:[%s166 + $0x48] sm:$0xf]
      %v193 = vld [vmem:[%s166 + $0x4c] sm:$0xf]
      %v194 = vld [vmem:[%s166 + $0x50] sm:$0xf]
      %v195 = vld [vmem:[%s166 + $0x54] sm:$0xf]
      %v196 = vld [vmem:[%s166 + $0x58] sm:$0xf]
      %v197 = vld [vmem:[%s166 + $0x5c] sm:$0xf]
      %v198 = vld [vmem:[%s166 + $0x60] sm:$0xf]
      %v199 = vld [vmem:[%s166 + $0x64] sm:$0xf]
      %v200 = vld [vmem:[%s166 + $0x68] sm:$0xf]
      %v201 = vld [vmem:[%s166 + $0x6c] sm:$0xf]
      %v202 = vld [vmem:[%s166 + $0x70] sm:$0xf]
      %v203 = vld [vmem:[%s166 + $0x74] sm:$0xf]
      %v204 = vld [vmem:[%s166 + $0x78] sm:$0xf]
      %v205 = vld [vmem:[%s166 + $0x7c] sm:$0xf]
      %v206 = vunpack.c.l.bf16 %v174
      %v207 = vunpack.c.l.bf16 %v175
      %v208 = vunpack.c.l.bf16 %v176
      %v209 = vunpack.c.l.bf16 %v177
      %v210 = vunpack.c.l.bf16 %v178
      %v211 = vunpack.c.l.bf16 %v179
      %v212 = vunpack.c.l.bf16 %v180
      %v213 = vunpack.c.l.bf16 %v181
      %v214 = vunpack.c.l.bf16 %v182
      %v215 = vunpack.c.l.bf16 %v183
      %v216 = vunpack.c.l.bf16 %v184
      %v217 = vunpack.c.l.bf16 %v185
      %v218 = vunpack.c.l.bf16 %v186
      %v219 = vunpack.c.l.bf16 %v187
      %v220 = vunpack.c.l.bf16 %v188
      %v221 = vunpack.c.l.bf16 %v189
      %v222 = vunpack.c.l.bf16 %v190
      %v223 = vunpack.c.l.bf16 %v191
      %v224 = vunpack.c.l.bf16 %v192
      %v225 = vunpack.c.l.bf16 %v193
      %v226 = vunpack.c.l.bf16 %v194
      %v227 = vunpack.c.l.bf16 %v195
      %v228 = vunpack.c.l.bf16 %v196
      %v229 = vunpack.c.l.bf16 %v197
      %v230 = vunpack.c.l.bf16 %v198
      %v231 = vunpack.c.l.bf16 %v199
      %v232 = vunpack.c.l.bf16 %v200
      %v233 = vunpack.c.l.bf16 %v201
      %v234 = vunpack.c.l.bf16 %v202
      %v235 = vunpack.c.l.bf16 %v203
      %v236 = vunpack.c.l.bf16 %v204
      %v237 = vunpack.c.l.bf16 %v205
      %v238 = vld [vmem:[%s1] sm:$0x1]
      %v240 = vperm.slane %v238, 0
      %v242 = vmul.f32 %v206, %v240
      %v243 = vmul.f32 %v207, %v240
      %v244 = vmul.f32 %v208, %v240
      %v245 = vmul.f32 %v209, %v240
      %v246 = vmul.f32 %v210, %v240
      %v247 = vmul.f32 %v211, %v240
      %v248 = vmul.f32 %v212, %v240
      %v249 = vmul.f32 %v213, %v240
      %v250 = vmul.f32 %v214, %v240
      %v251 = vmul.f32 %v215, %v240
      %v252 = vmul.f32 %v216, %v240
      %v253 = vmul.f32 %v217, %v240
      %v254 = vmul.f32 %v218, %v240
      %v255 = vmul.f32 %v219, %v240
      %v256 = vmul.f32 %v220, %v240
      %v257 = vmul.f32 %v221, %v240
      %v258 = vmul.f32 %v222, %v240
      %v259 = vmul.f32 %v223, %v240
      %v260 = vmul.f32 %v224, %v240
      %v261 = vmul.f32 %v225, %v240
      %v262 = vmul.f32 %v226, %v240
      %v263 = vmul.f32 %v227, %v240
      %v264 = vmul.f32 %v228, %v240
      %v265 = vmul.f32 %v229, %v240
      %v266 = vmul.f32 %v230, %v240
      %v267 = vmul.f32 %v231, %v240
      %v268 = vmul.f32 %v232, %v240
      %v269 = vmul.f32 %v233, %v240
      %v270 = vmul.f32 %v234, %v240
      %v271 = vmul.f32 %v235, %v240
      %v272 = vmul.f32 %v236, %v240
      %v273 = vmul.f32 %v237, %v240
      %v274 = vld [vmem:[%s2] sm:$0x1]
      %v276 = vperm.slane %v274, 0
      %v278 = vadd.f32 %v242, %v276
      %v279 = vadd.f32 %v243, %v276
      %v280 = vadd.f32 %v244, %v276
      %v281 = vadd.f32 %v245, %v276
      %v282 = vadd.f32 %v246, %v276
      %v283 = vadd.f32 %v247, %v276
      %v284 = vadd.f32 %v248, %v276
      %v285 = vadd.f32 %v249, %v276
      %v286 = vadd.f32 %v250, %v276
      %v287 = vadd.f32 %v251, %v276
      %v288 = vadd.f32 %v252, %v276
      %v289 = vadd.f32 %v253, %v276
      %v290 = vadd.f32 %v254, %v276
      %v291 = vadd.f32 %v255, %v276
      %v292 = vadd.f32 %v256, %v276
      %v293 = vadd.f32 %v257, %v276
      %v294 = vadd.f32 %v258, %v276
      %v295 = vadd.f32 %v259, %v276
      %v296 = vadd.f32 %v260, %v276
      %v297 = vadd.f32 %v261, %v276
      %v298 = vadd.f32 %v262, %v276
      %v299 = vadd.f32 %v263, %v276
      %v300 = vadd.f32 %v264, %v276
      %v301 = vadd.f32 %v265, %v276
      %v302 = vadd.f32 %v266, %v276
      %v303 = vadd.f32 %v267, %v276
      %v304 = vadd.f32 %v268, %v276
      %v305 = vadd.f32 %v269, %v276
      %v306 = vadd.f32 %v270, %v276
      %v307 = vadd.f32 %v271, %v276
      %v308 = vadd.f32 %v272, %v276
      %v309 = vadd.f32 %v273, %v276
      %v310 = vmax.f32 %v278, 0.0
      %v311 = vmax.f32 %v279, 0.0
      %v312 = vmax.f32 %v280, 0.0
      %v313 = vmax.f32 %v281, 0.0
      %v314 = vmax.f32 %v282, 0.0
      %v315 = vmax.f32 %v283, 0.0
      %v316 = vmax.f32 %v284, 0.0
      %v317 = vmax.f32 %v285, 0.0
      %v318 = vmax.f32 %v286, 0.0
      %v319 = vmax.f32 %v287, 0.0
      %v320 = vmax.f32 %v288, 0.0
      %v321 = vmax.f32 %v289, 0.0
      %v322 = vmax.f32 %v290, 0.0
      %v323 = vmax.f32 %v291, 0.0
      %v324 = vmax.f32 %v292, 0.0
      %v325 = vmax.f32 %v293, 0.0
      %v326 = vmax.f32 %v294, 0.0
      %v327 = vmax.f32 %v295, 0.0
      %v328 = vmax.f32 %v296, 0.0
      %v329 = vmax.f32 %v297, 0.0
      %v330 = vmax.f32 %v298, 0.0
      %v331 = vmax.f32 %v299, 0.0
      %v332 = vmax.f32 %v300, 0.0
      %v333 = vmax.f32 %v301, 0.0
      %v334 = vmax.f32 %v302, 0.0
      %v335 = vmax.f32 %v303, 0.0
      %v336 = vmax.f32 %v304, 0.0
      %v337 = vmax.f32 %v305, 0.0
      %v338 = vmax.f32 %v306, 0.0
      %v339 = vmax.f32 %v307, 0.0
      %v340 = vmax.f32 %v308, 0.0
      %v341 = vmax.f32 %v309, 0.0
      %v342 = vpack.c.bf16 %v310, %v310
      %v343 = vpack.c.bf16 %v311, %v311
      %v344 = vpack.c.bf16 %v312, %v312
      %v345 = vpack.c.bf16 %v313, %v313
      %v346 = vpack.c.bf16 %v314, %v314
      %v347 = vpack.c.bf16 %v315, %v315
      %v348 = vpack.c.bf16 %v316, %v316
      %v349 = vpack.c.bf16 %v317, %v317
      %v350 = vpack.c.bf16 %v318, %v318
      %v351 = vpack.c.bf16 %v319, %v319
      %v352 = vpack.c.bf16 %v320, %v320
      %v353 = vpack.c.bf16 %v321, %v321
      %v354 = vpack.c.bf16 %v322, %v322
      %v355 = vpack.c.bf16 %v323, %v323
      %v356 = vpack.c.bf16 %v324, %v324
      %v357 = vpack.c.bf16 %v325, %v325
      %v358 = vpack.c.bf16 %v326, %v326
      %v359 = vpack.c.bf16 %v327, %v327
      %v360 = vpack.c.bf16 %v328, %v328
      %v361 = vpack.c.bf16 %v329, %v329
      %v362 = vpack.c.bf16 %v330, %v330
      %v363 = vpack.c.bf16 %v331, %v331
      %v364 = vpack.c.bf16 %v332, %v332
      %v365 = vpack.c.bf16 %v333, %v333
      %v366 = vpack.c.bf16 %v334, %v334
      %v367 = vpack.c.bf16 %v335, %v335
      %v368 = vpack.c.bf16 %v336, %v336
      %v369 = vpack.c.bf16 %v337, %v337
      %v370 = vpack.c.bf16 %v338, %v338
      %v371 = vpack.c.bf16 %v339, %v339
      %v372 = vpack.c.bf16 %v340, %v340
      %v373 = vpack.c.bf16 %v341, %v341
      %374 = vst [vmem:[%s172] sm:$0xf] %v342
      %375 = vst [vmem:[%s172 + $0x4] sm:$0xf] %v343
      %376 = vst [vmem:[%s172 + $0x8] sm:$0xf] %v344
      %377 = vst [vmem:[%s172 + $0xc] sm:$0xf] %v345
      %378 = vst [vmem:[%s172 + $0x10] sm:$0xf] %v346
      %379 = vst [vmem:[%s172 + $0x14] sm:$0xf] %v347
      %380 = vst [vmem:[%s172 + $0x18] sm:$0xf] %v348
      %381 = vst [vmem:[%s172 + $0x1c] sm:$0xf] %v349
      %382 = vst [vmem:[%s172 + $0x20] sm:$0xf] %v350
      %383 = vst [vmem:[%s172 + $0x24] sm:$0xf] %v351
      %384 = vst [vmem:[%s172 + $0x28] sm:$0xf] %v352
      %385 = vst [vmem:[%s172 + $0x2c] sm:$0xf] %v353
      %386 = vst [vmem:[%s172 + $0x30] sm:$0xf] %v354
      %387 = vst [vmem:[%s172 + $0x34] sm:$0xf] %v355
      %388 = vst [vmem:[%s172 + $0x38] sm:$0xf] %v356
      %389 = vst [vmem:[%s172 + $0x3c] sm:$0xf] %v357
      %390 = vst [vmem:[%s172 + $0x40] sm:$0xf] %v358
      %391 = vst [vmem:[%s172 + $0x44] sm:$0xf] %v359
      %392 = vst [vmem:[%s172 + $0x48] sm:$0xf] %v360
      %393 = vst [vmem:[%s172 + $0x4c] sm:$0xf] %v361
      %394 = vst [vmem:[%s172 + $0x50] sm:$0xf] %v362
      %395 = vst [vmem:[%s172 + $0x54] sm:$0xf] %v363
      %396 = vst [vmem:[%s172 + $0x58] sm:$0xf] %v364
      %397 = vst [vmem:[%s172 + $0x5c] sm:$0xf] %v365
      %398 = vst [vmem:[%s172 + $0x60] sm:$0xf] %v366
      %399 = vst [vmem:[%s172 + $0x64] sm:$0xf] %v367
      %400 = vst [vmem:[%s172 + $0x68] sm:$0xf] %v368
      %401 = vst [vmem:[%s172 + $0x6c] sm:$0xf] %v369
      %402 = vst [vmem:[%s172 + $0x70] sm:$0xf] %v370
      %403 = vst [vmem:[%s172 + $0x74] sm:$0xf] %v371
      %404 = vst [vmem:[%s172 + $0x78] sm:$0xf] %v372
      %405 = vst [vmem:[%s172 + $0x7c] sm:$0xf] %v373
      %s406 = smul.u32 32, %s14
      %p407 = scmp.lt.s32.totalorder %s406, 63
      %s408 = scalar_select %p407, %s406, 63
      %s409 = smul.addr %s408, 4
      %s410 = scalar_lea.vmem %s3, %s409
      // Predicated region
      $region33: #{deformable_cnv2_forward.5} parent=31 // pred_check
        %p411 = pneg %p100
      $region34: #{deformable_cnv2_forward.5} parent=31 // pred_check_branch
        %413 = sbr.rel (%p411) target = $region36
      $region35: #{deformable_cnv2_forward.5} parent=31 // pred_region
        %s414 = smul.u32 32, %s14
      $region36: #{deformable_cnv2_forward.5} parent=31 // pred_fallthru
        _
    $region32: #{deformable_cnv2_forward.5} parent=5 // pred_fallthru
      _
    %p415 = scmp.le.s32.totalorder 2, %s9
    // Predicated region
    $region37: #{deformable_cnv2_forward.5} parent=5 // pred_check
      %p416 = pneg %p415
    $region38: #{deformable_cnv2_forward.5} parent=5 // pred_check_branch
      %418 = sbr.rel (%p416) target = $region40
    $region39: #{deformable_cnv2_forward.5} parent=5 // pred_region
      %s419 = ssub.s32 %s9, 2
      // Predicated region
      $region41: #{deformable_cnv2_forward.5} parent=39 // pred_check
        %p420 = pneg %p106
      $region42: #{deformable_cnv2_forward.5} parent=39 // pred_check_branch
        %422 = sbr.rel (%p420) target = $region44
      $region43: #{deformable_cnv2_forward.5} parent=39 // pred_region
        %s423 = smul.u32 32, %s15
        %p424 = scmp.lt.s32.totalorder %s423, 63
        %s425 = scalar_select %p424, %s423, 63
        %s426 = smul.addr %s425, 4
        %s427 = scalar_lea.vmem %s3, %s426
      $region44: #{deformable_cnv2_forward.5} parent=39 // pred_fallthru
        _
    $region40: #{deformable_cnv2_forward.5} parent=5 // pred_fallthru
      _
  $region6: #{deformable_cnv2_forward.5} parent=0 // loop_footer
    %s13 = sadd.s32 1, %s9
  $region7: #{deformable_cnv2_forward.5} parent=0 // loop_footer_branch
    %8 = sbr.rel target = $region3
  $region8: #{deformable_cnv2_forward.5} parent=0 // loop_exit
    _

</llo_original>
